<compile_context>
chip_gen: v7x
topology: tpu7x:2x2x1
jax: 0.10.0
libtpu: 0.0.40
codegen_flags: <defaults>
</compile_context>

<pallas_src>
import functools

import numpy as np
import jax
import jax.numpy as jnp
from jax import lax
from jax.experimental import pallas as pl
from jax.experimental.pallas import tpu as pltpu

BN_EPS = 1e-5
LRELU_SLOPE = 0.2


def _round_up(a, m):
    return ((a + m - 1) // m) * m


@functools.lru_cache(maxsize=None)
def _vmem_limit_bytes():
    """Generation-aware scoped-VMEM request: bigger on 128 MiB parts, headroom on v7x (64 MiB)."""
    try:
        cap = int(pltpu.get_tpu_info().vmem_capacity_bytes)
    except Exception:
        return 32 * 1024 * 1024
    if cap >= 128 * 1024 * 1024:
        return 96 * 1024 * 1024
    return min(48 * 1024 * 1024, (cap * 3) // 4)


def disc_classifier_forward(sent_code, img_code, params, kernel_size,
                            row_tile=None, single_buffer_consts=True):
    """params = (w1 (enc, enc+emb), gamma (enc,), beta (enc,), w2 (1, enc, k, k), b2 ())."""
    w1, gamma, beta, w2, b2 = params
    B, C, H, W = img_code.shape
    k = kernel_size
    Ho, Wo = H - k + 1, W - k + 1
    assert Ho >= 1 and Wo >= 1
    WE = W * C
    WOP = max(128, _round_up(Wo, 128))         # lane-padded output width (covers any Wo)
    KW = k * WOP
    HW = H * W
    N_pix = B * HW

    # ---- split the 1x1-conv weight; sentence branch becomes a per-batch bias row ----
    w1_img = w1[:, :C]                          # (C_out, C_in)
    w1_sent = w1[:, C:]                         # (C_out, emb)
    sent_contrib = jnp.dot(sent_code, w1_sent.T)   # (B, C), tiny

    # ---- exact BN batch statistics from tiny input moments (stats kernel removed) ----
    # h[b,o,p] = (w1_img @ x[b,:,p])[o] + s[b,o]  ->  moments follow algebraically.
    x2d = img_code.reshape(B, C, HW).astype(jnp.float32)
    m_b = jnp.sum(x2d, axis=2)                                   # (B, C) channel sums
    gram = jnp.einsum('bcp,bdp->cd', x2d, x2d)                   # (C, C) channel Gram (summed over b)
    wm = jnp.dot(m_b, w1_img.T)                                  # (B, C) = w1_img @ m_b
    s = sent_contrib
    sum_h = jnp.sum(wm, axis=0) + HW * jnp.sum(s, axis=0)
    sum_h2 = (jnp.einsum('oc,cd,od->o', w1_img, gram, w1_img)
              + 2.0 * jnp.sum(s * wm, axis=0) + HW * jnp.sum(s * s, axis=0))
    mean = sum_h / N_pix
    # TODO(synk): E[x^2]-E[x]^2 in f32 can lose precision for strongly offset inputs; switch to
    # moments around a per-channel shift if that regime matters.
    var = jnp.maximum(sum_h2 / N_pix - mean * mean, 0.0)         # biased variance (train-mode BN)
    inv_std = lax.rsqrt(var + BN_EPS)
    scale = gamma * inv_std
    shift = beta - mean * scale

    # ---- output-row tiling (second parallel grid axis; halo via in-VMEM row slice) ----
    Hop0 = _round_up(Ho, 8)
    if row_tile is None:
        Hot = min(Hop0, 64)
    else:
        Hot = max(8, _round_up(min(row_tile, Hop0), 8))
    nTo = -(-Hop0 // Hot)
    Hop = nTo * Hot
    HIN = _round_up(H, 8) if nTo == 1 else _round_up(Hot + k - 1, 8)
    H_pad = max(_round_up(H, 8), (nTo - 1) * Hot + HIN)

    # ---- image to lane-dense (rows=H, lanes=W*C) channels-last layout, rows zero-padded ----
    # TODO(synk): this NCHW->NHWC transpose is still one XLA pass over the image; folding it into
    # the kernel needs an in-VMEM relayout (pltpu.einshape) and is left for a follow-up.
    x_hwc = jnp.transpose(img_code, (0, 2, 3, 1)).reshape(B, H, WE).astype(jnp.bfloat16)
    x_pad = jnp.pad(x_hwc, ((0, 0), (0, H_pad - H), (0, 0)))

    # ---- block-diagonal 1x1-conv weight on the (W*C) lane axis, BN scale folded columnwise ----
    # TODO(synk): (W*C)^2 weight grows quadratically; chunk the contraction (extra 'arbitrary'
    # grid axis + f32 VMEM accumulator) before it outgrows v7x's 64 MiB VMEM.
    w1_img_bn = w1_img * scale[:, None]
    w1_big = (jnp.eye(W, dtype=jnp.float32)[:, None, :, None]
              * w1_img_bn.T[None, :, None, :]).reshape(WE, WE).astype(jnp.bfloat16)

    # ---- per-batch bias row with BN scale/shift folded in (stays f32, added post-MXU) ----
    sent_bn = sent_contrib * scale[None, :] + shift[None, :]             # (B, C)
    sent_big = jnp.tile(sent_bn[:, None, :], (1, W, 1)).reshape(B, 1, WE).astype(jnp.float32)

    # ---- band matrix Q: channel + dj (W-direction) contraction of the k x k conv as one matmul;
    #      output columns grouped per di, lane-padded to WOP (multiple of 128 -> fills MXU cols) ----
    j_np = np.arange(W)[:, None]
    jo_np = np.arange(WOP)[None, :]
    dj_np = j_np - jo_np
    valid = jnp.asarray((dj_np >= 0) & (dj_np < k) & (jo_np < Wo))        # (W, WOP)
    dj_clip = np.clip(dj_np, 0, k - 1)
    w2_g = w2[0][:, :, dj_clip]                                           # (C, k, W, WOP)
    q_mat = jnp.where(valid[None, None], w2_g, 0.0)
    q_mat = jnp.transpose(q_mat, (2, 0, 1, 3)).reshape(WE, KW).astype(jnp.bfloat16)

    # ---- selection matrices for the di (H-direction) accumulation within one row tile ----
    r_np = np.arange(Hot)[None, :, None]
    i_np = np.arange(HIN)[None, None, :]
    d_np = np.arange(k)[:, None, None]
    sel = jnp.asarray((i_np == r_np + d_np).astype(np.float32))           # (k, Hot, HIN)

    b2_2d = jnp.reshape(b2, (1, 1)).astype(jnp.float32)

    # ======= fused kernel: 1x1 conv (+BN folded) + LeakyReLU + k x k conv, all on the MXU =======
    def fused_kernel(x_ref, w_ref, s_ref, q_ref, sel_ref, bias_ref, o_ref):
        if nTo == 1:
            xw = x_ref[0]                                                 # (HIN, WE)
        else:
            r0 = pl.multiple_of(pl.program_id(1) * Hot, 8)
            xw = x_ref[0, pl.ds(r0, HIN), :]                              # halo row window
        # 1x1 conv with BN pre-folded (bf16 MXU, f32 accumulation) + per-batch bias row.
        h = jnp.dot(xw, w_ref[...], preferred_element_type=jnp.float32) + s_ref[0]
        a = jnp.where(h > 0, h, LRELU_SLOPE * h)                          # LeakyReLU(0.2)
        # W-direction (dj) + channel contraction: one band-matrix MXU matmul, no window slices.
        g = jnp.dot(a.astype(jnp.bfloat16), q_ref[...],
                    preferred_element_type=jnp.float32)                   # (HIN, k*WOP)
        # H-direction (di) accumulation: k tiny selection matmuls on lane-aligned column blocks.
        acc = jnp.full((Hot, WOP), bias_ref[0, 0], dtype=jnp.float32)
        for d in range(k):                                                # static unroll, k tiny
            acc = acc + jnp.dot(sel_ref[d], g[:, d * WOP:(d + 1) * WOP],
                                preferred_element_type=jnp.float32)
        o_ref[...] = acc[None]                                            # dense (8,128)-aligned store

    def const_spec(block_shape):
        idx = lambda b, t: (0,) * len(block_shape)
        if single_buffer_consts:
            # Grid-invariant operands: single buffer (no pointless double-buffer VMEM).
            return pl.BlockSpec(block_shape, idx, pipeline_mode=pl.Buffered(1))
        return pl.BlockSpec(block_shape, idx)

    out_slab = pl.pallas_call(
        fused_kernel,
        out_shape=jax.ShapeDtypeStruct((B, Hop, WOP), jnp.float32),
        grid=(B, nTo),
        in_specs=[pl.BlockSpec((1, H_pad, WE), lambda b, t: (b, 0, 0)),   # re-DMA'd only when b changes
                  const_spec((WE, WE)),
                  pl.BlockSpec((1, 1, WE), lambda b, t: (b, 0, 0)),
                  const_spec((WE, KW)),
                  const_spec((k, Hot, HIN)),
                  pl.BlockSpec(memory_space=pltpu.MemorySpace.SMEM)],
        out_specs=pl.BlockSpec((1, Hot, WOP), lambda b, t: (b, t, 0)),
        compiler_params=pltpu.CompilerParams(
            dimension_semantics=("parallel", "parallel"),
            vmem_limit_bytes=_vmem_limit_bytes()),
    )(x_pad, w1_big, sent_big, q_mat, sel, b2_2d)

    # PyTorch: output.view(-1, chn) with chn == 1 (strip row/lane padding first).
    return out_slab[:, :Ho, :Wo].reshape(-1, 1)


def reference_forward(sent_code, img_code, params, kernel_size):
    """Plain-JAX reference (mirrors the PyTorch module, training-mode BN)."""
    w1, gamma, beta, w2, b2 = params
    B, C_enc, H, W = img_code.shape
    C_emb = sent_code.shape[1]
    k = kernel_size
    Ho, Wo = H - k + 1, W - k + 1

    sent_b = jnp.broadcast_to(sent_code[:, :, None, None], (B, C_emb, H, W))
    x = jnp.concatenate([img_code, sent_b], axis=1)                        # NCHW
    h = jnp.einsum('oi,bihw->bohw', w1, x)                                 # 1x1 conv, no bias
    mean = jnp.mean(h, axis=(0, 2, 3), keepdims=True)
    var = jnp.mean((h - mean) ** 2, axis=(0, 2, 3), keepdims=True)
    h = (h - mean) * lax.rsqrt(var + BN_EPS)
    h = h * gamma[None, :, None, None] + beta[None, :, None, None]
    h = jnp.where(h > 0, h, LRELU_SLOPE * h)
    out = jnp.zeros((B, Ho, Wo), jnp.float32) + b2
    for di in range(k):
        for dj in range(k):
            out = out + jnp.einsum('bchw,c->bhw',
                                   h[:, :, di:di + Ho, dj:dj + Wo], w2[0, :, di, dj])
    return out.reshape(-1, 1)


if __name__ == "__main__":
    # Small shapes consistent with the module's forward.
    B, enc_dim, emb_dim, H, W, kernel_size = 2, 8, 8, 16, 16, 4

    key = jax.random.PRNGKey(0)
    ks = jax.random.split(key, 7)
    sent_code = jax.random.normal(ks[0], (B, emb_dim), jnp.float32)
    img_code = jax.random.normal(ks[1], (B, enc_dim, H, W), jnp.float32)

    # Deterministic synthetic parameters (shapes dictated by the module __init__).
    w1 = 0.1 * jax.random.normal(ks[2], (enc_dim, enc_dim + emb_dim), jnp.float32)    # 1x1 conv
    gamma = 1.0 + 0.1 * jax.random.normal(ks[3], (enc_dim,), jnp.float32)             # BN weight
    beta = 0.1 * jax.random.normal(ks[4], (enc_dim,), jnp.float32)                    # BN bias
    w2 = 0.1 * jax.random.normal(ks[5], (1, enc_dim, kernel_size, kernel_size), jnp.float32)
    b2 = 0.05 * jax.random.normal(ks[6], (), jnp.float32)
    params = (w1, gamma, beta, w2, b2)
    # TODO(synk): training-mode BatchNorm running-stat (momentum EMA) buffer updates are a module
    # side effect, not part of the returned tensor; not modeled here.

    ref = reference_forward(sent_code, img_code, params, kernel_size)
    Ho, Wo = H - kernel_size + 1, W - kernel_size + 1

    def run_and_check(single_buffer):
        # rt=None -> single row tile per batch; rt=8 -> exercises the multi-tile halo path.
        for rt in (None, 8):
            fwd = jax.jit(functools.partial(disc_classifier_forward, kernel_size=kernel_size,
                                            row_tile=rt, single_buffer_consts=single_buffer))
            out = jax.block_until_ready(fwd(sent_code, img_code, params))
            assert out.shape == (B * Ho * Wo, 1), out.shape
            err = float(jnp.max(jnp.abs(out - ref)))
            assert jnp.allclose(out, ref, atol=2.5e-2, rtol=2.5e-2), (rt, err)

    try:
        run_and_check(single_buffer=True)
    except Exception:
        # Fallback in case this jax build rejects pl.Buffered(1) single-buffering of constants.
        run_and_check(single_buffer=False)

    print("KERNEL_OK")
</pallas_src>

<mosaic_0001>
module attributes {stable_mosaic.version = 11 : i64} {
  func.func @fused_kernel(%arg0: i32, %arg1: i32, %arg2: memref<1x16x128xbf16, #tpu.memory_space<vmem>>, %arg3: memref<128x128xbf16, #tpu.memory_space<vmem>>, %arg4: memref<1x1x128xf32, #tpu.memory_space<vmem>>, %arg5: memref<128x512xbf16, #tpu.memory_space<vmem>>, %arg6: memref<4x16x16xf32, #tpu.memory_space<vmem>>, %arg7: memref<1x1xf32, #tpu.memory_space<smem>>, %arg8: memref<1x16x128xf32, #tpu.memory_space<vmem>>) attributes {dimension_semantics = [#tpu.dimension_semantics<parallel>, #tpu.dimension_semantics<parallel>], iteration_bounds = array<i64: 2, 1>, scalar_prefetch = 0 : i64, scratch_operands = 0 : i64, tpu.core_type = #tpu.core_type<tc>, window_params = [{transform_indices = @transform_0, window_bounds = array<i64: 1, 16, 128>}, {pipeline_mode = #tpu.pipeline_mode<synchronous>, transform_indices = @transform_1, window_bounds = array<i64: 128, 128>}, {transform_indices = @transform_2, window_bounds = array<i64: 1, 1, 128>}, {pipeline_mode = #tpu.pipeline_mode<synchronous>, transform_indices = @transform_3, window_bounds = array<i64: 128, 512>}, {pipeline_mode = #tpu.pipeline_mode<synchronous>, transform_indices = @transform_4, window_bounds = array<i64: 4, 16, 16>}, {transform_indices = @transform_5, window_bounds = array<i64: 1, 1>}, {transform_indices = @transform_6, window_bounds = array<i64: 1, 16, 128>}]} {
    %c0 = arith.constant 0 : index
    %c0_0 = arith.constant 0 : index
    %c0_1 = arith.constant 0 : index
    %0 = vector.load %arg2[%c0, %c0_0, %c0_1] : memref<1x16x128xbf16, #tpu.memory_space<vmem>>, vector<1x16x128xbf16>
    %1 = vector.shape_cast %0 : vector<1x16x128xbf16> to vector<16x128xbf16>
    %c0_2 = arith.constant 0 : index
    %c0_3 = arith.constant 0 : index
    %2 = vector.load %arg3[%c0_2, %c0_3] : memref<128x128xbf16, #tpu.memory_space<vmem>>, vector<128x128xbf16>
    %cst = arith.constant dense<0.000000e+00> : vector<16x128xf32>
    %3 = tpu.matmul %1, %2, %cst {dimension_numbers = #tpu.dot_dimension_numbers<[1], [0], [0], [1], [0, 0, 1, 1], [], []>} : vector<16x128xbf16>, vector<128x128xbf16>, vector<16x128xf32> -> vector<16x128xf32>
    %c0_4 = arith.constant 0 : index
    %c0_5 = arith.constant 0 : index
    %c0_6 = arith.constant 0 : index
    %4 = vector.load %arg4[%c0_4, %c0_5, %c0_6] : memref<1x1x128xf32, #tpu.memory_space<vmem>>, vector<1x1x128xf32>
    %5 = vector.shape_cast %4 : vector<1x1x128xf32> to vector<1x128xf32>
    %6 = vector.broadcast %5 : vector<1x128xf32> to vector<16x128xf32>
    %7 = arith.addf %3, %6 : vector<16x128xf32>
    %cst_7 = arith.constant 0.000000e+00 : f32
    %8 = vector.broadcast %cst_7 : f32 to vector<16x128xf32>
    %9 = arith.cmpf ogt, %7, %8 : vector<16x128xf32>
    %cst_8 = arith.constant 2.000000e-01 : f32
    %10 = vector.broadcast %cst_8 : f32 to vector<16x128xf32>
    %11 = arith.mulf %10, %7 : vector<16x128xf32>
    %12 = arith.select %9, %7, %11 : vector<16x128xi1>, vector<16x128xf32>
    %13 = arith.truncf %12 : vector<16x128xf32> to vector<16x128xbf16>
    %c0_9 = arith.constant 0 : index
    %c0_10 = arith.constant 0 : index
    %14 = vector.load %arg5[%c0_9, %c0_10] : memref<128x512xbf16, #tpu.memory_space<vmem>>, vector<128x512xbf16>
    %cst_11 = arith.constant dense<0.000000e+00> : vector<16x512xf32>
    %15 = tpu.matmul %13, %14, %cst_11 {dimension_numbers = #tpu.dot_dimension_numbers<[1], [0], [0], [1], [0, 0, 1, 1], [], []>} : vector<16x128xbf16>, vector<128x512xbf16>, vector<16x512xf32> -> vector<16x512xf32>
    %c0_12 = arith.constant 0 : index
    %c0_13 = arith.constant 0 : index
    %16 = memref.load %arg7[%c0_12, %c0_13] : memref<1x1xf32, #tpu.memory_space<smem>>
    %17 = vector.broadcast %16 : f32 to vector<16x128xf32>
    %c0_14 = arith.constant 0 : index
    %c0_15 = arith.constant 0 : index
    %c0_16 = arith.constant 0 : index
    %18 = vector.load %arg6[%c0_14, %c0_15, %c0_16] : memref<4x16x16xf32, #tpu.memory_space<vmem>>, vector<1x16x16xf32>
    %19 = vector.shape_cast %18 : vector<1x16x16xf32> to vector<16x16xf32>
    %20 = vector.extract_strided_slice %15 {offsets = [0, 0], sizes = [16, 128], strides = [1, 1]} : vector<16x512xf32> to vector<16x128xf32>
    %cst_17 = arith.constant dense<0.000000e+00> : vector<16x128xf32>
    %21 = tpu.matmul %19, %20, %cst_17 {dimension_numbers = #tpu.dot_dimension_numbers<[1], [0], [0], [1], [0, 0, 1, 1], [], []>} : vector<16x16xf32>, vector<16x128xf32>, vector<16x128xf32> -> vector<16x128xf32>
    %22 = arith.addf %17, %21 : vector<16x128xf32>
    %c1 = arith.constant 1 : index
    %c0_18 = arith.constant 0 : index
    %c0_19 = arith.constant 0 : index
    %23 = vector.load %arg6[%c1, %c0_18, %c0_19] : memref<4x16x16xf32, #tpu.memory_space<vmem>>, vector<1x16x16xf32>
    %24 = vector.shape_cast %23 : vector<1x16x16xf32> to vector<16x16xf32>
    %25 = vector.extract_strided_slice %15 {offsets = [0, 128], sizes = [16, 128], strides = [1, 1]} : vector<16x512xf32> to vector<16x128xf32>
    %cst_20 = arith.constant dense<0.000000e+00> : vector<16x128xf32>
    %26 = tpu.matmul %24, %25, %cst_20 {dimension_numbers = #tpu.dot_dimension_numbers<[1], [0], [0], [1], [0, 0, 1, 1], [], []>} : vector<16x16xf32>, vector<16x128xf32>, vector<16x128xf32> -> vector<16x128xf32>
    %27 = arith.addf %22, %26 : vector<16x128xf32>
    %c2 = arith.constant 2 : index
    %c0_21 = arith.constant 0 : index
    %c0_22 = arith.constant 0 : index
    %28 = vector.load %arg6[%c2, %c0_21, %c0_22] : memref<4x16x16xf32, #tpu.memory_space<vmem>>, vector<1x16x16xf32>
    %29 = vector.shape_cast %28 : vector<1x16x16xf32> to vector<16x16xf32>
    %30 = vector.extract_strided_slice %15 {offsets = [0, 256], sizes = [16, 128], strides = [1, 1]} : vector<16x512xf32> to vector<16x128xf32>
    %cst_23 = arith.constant dense<0.000000e+00> : vector<16x128xf32>
    %31 = tpu.matmul %29, %30, %cst_23 {dimension_numbers = #tpu.dot_dimension_numbers<[1], [0], [0], [1], [0, 0, 1, 1], [], []>} : vector<16x16xf32>, vector<16x128xf32>, vector<16x128xf32> -> vector<16x128xf32>
    %32 = arith.addf %27, %31 : vector<16x128xf32>
    %c3 = arith.constant 3 : index
    %c0_24 = arith.constant 0 : index
    %c0_25 = arith.constant 0 : index
    %33 = vector.load %arg6[%c3, %c0_24, %c0_25] : memref<4x16x16xf32, #tpu.memory_space<vmem>>, vector<1x16x16xf32>
    %34 = vector.shape_cast %33 : vector<1x16x16xf32> to vector<16x16xf32>
    %35 = vector.extract_strided_slice %15 {offsets = [0, 384], sizes = [16, 128], strides = [1, 1]} : vector<16x512xf32> to vector<16x128xf32>
    %cst_26 = arith.constant dense<0.000000e+00> : vector<16x128xf32>
    %36 = tpu.matmul %34, %35, %cst_26 {dimension_numbers = #tpu.dot_dimension_numbers<[1], [0], [0], [1], [0, 0, 1, 1], [], []>} : vector<16x16xf32>, vector<16x128xf32>, vector<16x128xf32> -> vector<16x128xf32>
    %37 = arith.addf %32, %36 : vector<16x128xf32>
    %38 = vector.shape_cast %37 : vector<16x128xf32> to vector<1x16x128xf32>
    %c0_27 = arith.constant 0 : index
    %c0_28 = arith.constant 0 : index
    %c0_29 = arith.constant 0 : index
    %39 = vector.load %arg8[%c0_27, %c0_28, %c0_29] : memref<1x16x128xf32, #tpu.memory_space<vmem>>, vector<1x16x128xf32>
    tpu.vector_store %arg8[%c0_27, %c0_28, %c0_29], %38 {strides = array<i32>} : memref<1x16x128xf32, #tpu.memory_space<vmem>>, vector<1x16x128xf32>,
    return
  }
  func.func @transform_0(%arg0: i32, %arg1: i32) -> (i32, i32, i32) {
    %c0_i32 = arith.constant 0 : i32
    %c0_i32_0 = arith.constant 0 : i32
    %c0_i32_1 = arith.constant 0 : i32
    return %arg0, %c0_i32, %c0_i32_0 : i32, i32, i32
  }
  func.func @transform_1(%arg0: i32, %arg1: i32) -> (i32, i32) {
    %c0_i32 = arith.constant 0 : i32
    %c0_i32_0 = arith.constant 0 : i32
    %c0_i32_1 = arith.constant 0 : i32
    return %c0_i32, %c0_i32_0 : i32, i32
  }
  func.func @transform_2(%arg0: i32, %arg1: i32) -> (i32, i32, i32) {
    %c0_i32 = arith.constant 0 : i32
    %c0_i32_0 = arith.constant 0 : i32
    %c0_i32_1 = arith.constant 0 : i32
    return %arg0, %c0_i32, %c0_i32_0 : i32, i32, i32
  }
  func.func @transform_3(%arg0: i32, %arg1: i32) -> (i32, i32) {
    %c0_i32 = arith.constant 0 : i32
    %c0_i32_0 = arith.constant 0 : i32
    %c0_i32_1 = arith.constant 0 : i32
    return %c0_i32, %c0_i32_0 : i32, i32
  }
  func.func @transform_4(%arg0: i32, %arg1: i32) -> (i32, i32, i32) {
    %c0_i32 = arith.constant 0 : i32
    %c0_i32_0 = arith.constant 0 : i32
    %c0_i32_1 = arith.constant 0 : i32
    %c0_i32_2 = arith.constant 0 : i32
    return %c0_i32, %c0_i32_0, %c0_i32_1 : i32, i32, i32
  }
  func.func @transform_5(%arg0: i32, %arg1: i32) -> (i32, i32) {
    %c0_i32 = arith.constant 0 : i32
    %c0_i32_0 = arith.constant 0 : i32
    %c0_i32_1 = arith.constant 0 : i32
    return %c0_i32, %c0_i32_0 : i32, i32
  }
  func.func @transform_6(%arg0: i32, %arg1: i32) -> (i32, i32, i32) {
    %c0_i32 = arith.constant 0 : i32
    %c0_i32_0 = arith.constant 0 : i32
    return %arg0, %arg1, %c0_i32 : i32, i32, i32
  }
}

module attributes {stable_mosaic.version = 11 : i64} {
  func.func @fused_kernel(%arg0: i32, %arg1: i32, %arg2: memref<1x16x128xbf16, #tpu.memory_space<vmem>>, %arg3: memref<128x128xbf16, #tpu.memory_space<vmem>>, %arg4: memref<1x1x128xf32, #tpu.memory_space<vmem>>, %arg5: memref<128x512xbf16, #tpu.memory_space<vmem>>, %arg6: memref<4x16x16xf32, #tpu.memory_space<vmem>>, %arg7: memref<1x1xf32, #tpu.memory_space<smem>>, %arg8: memref<1x16x128xf32, #tpu.memory_space<vmem>>) attributes {dimension_semantics = [#tpu.dimension_semantics<parallel>, #tpu.dimension_semantics<parallel>], iteration_bounds = array<i64: 2, 1>, scalar_prefetch = 0 : i64, scratch_operands = 0 : i64, tpu.core_type = #tpu.core_type<tc>, window_params = [{transform_indices = @transform_0, window_bounds = array<i64: 1, 16, 128>}, {pipeline_mode = #tpu.pipeline_mode<synchronous>, transform_indices = @transform_1, window_bounds = array<i64: 128, 128>}, {transform_indices = @transform_2, window_bounds = array<i64: 1, 1, 128>}, {pipeline_mode = #tpu.pipeline_mode<synchronous>, transform_indices = @transform_3, window_bounds = array<i64: 128, 512>}, {pipeline_mode = #tpu.pipeline_mode<synchronous>, transform_indices = @transform_4, window_bounds = array<i64: 4, 16, 16>}, {transform_indices = @transform_5, window_bounds = array<i64: 1, 1>}, {transform_indices = @transform_6, window_bounds = array<i64: 1, 16, 128>}]} {
    %c0 = arith.constant 0 : index
    %c0_0 = arith.constant 0 : index
    %c0_1 = arith.constant 0 : index
    %0 = vector.load %arg2[%c0, %c0_0, %c0_1] : memref<1x16x128xbf16, #tpu.memory_space<vmem>>, vector<1x16x128xbf16>
    %1 = vector.shape_cast %0 : vector<1x16x128xbf16> to vector<16x128xbf16>
    %c0_2 = arith.constant 0 : index
    %c0_3 = arith.constant 0 : index
    %2 = vector.load %arg3[%c0_2, %c0_3] : memref<128x128xbf16, #tpu.memory_space<vmem>>, vector<128x128xbf16>
    %cst = arith.constant dense<0.000000e+00> : vector<16x128xf32>
    %3 = tpu.matmul %1, %2, %cst {dimension_numbers = #tpu.dot_dimension_numbers<[1], [0], [0], [1], [0, 0, 1, 1], [], []>} : vector<16x128xbf16>, vector<128x128xbf16>, vector<16x128xf32> -> vector<16x128xf32>
    %c0_4 = arith.constant 0 : index
    %c0_5 = arith.constant 0 : index
    %c0_6 = arith.constant 0 : index
    %4 = vector.load %arg4[%c0_4, %c0_5, %c0_6] : memref<1x1x128xf32, #tpu.memory_space<vmem>>, vector<1x1x128xf32>
    %5 = vector.shape_cast %4 : vector<1x1x128xf32> to vector<1x128xf32>
    %6 = vector.broadcast %5 : vector<1x128xf32> to vector<16x128xf32>
    %7 = arith.addf %3, %6 : vector<16x128xf32>
    %cst_7 = arith.constant 0.000000e+00 : f32
    %8 = vector.broadcast %cst_7 : f32 to vector<16x128xf32>
    %9 = arith.cmpf ogt, %7, %8 : vector<16x128xf32>
    %cst_8 = arith.constant 2.000000e-01 : f32
    %10 = vector.broadcast %cst_8 : f32 to vector<16x128xf32>
    %11 = arith.mulf %10, %7 : vector<16x128xf32>
    %12 = arith.select %9, %7, %11 : vector<16x128xi1>, vector<16x128xf32>
    %13 = arith.truncf %12 : vector<16x128xf32> to vector<16x128xbf16>
    %c0_9 = arith.constant 0 : index
    %c0_10 = arith.constant 0 : index
    %14 = vector.load %arg5[%c0_9, %c0_10] : memref<128x512xbf16, #tpu.memory_space<vmem>>, vector<128x512xbf16>
    %cst_11 = arith.constant dense<0.000000e+00> : vector<16x512xf32>
    %15 = tpu.matmul %13, %14, %cst_11 {dimension_numbers = #tpu.dot_dimension_numbers<[1], [0], [0], [1], [0, 0, 1, 1], [], []>} : vector<16x128xbf16>, vector<128x512xbf16>, vector<16x512xf32> -> vector<16x512xf32>
    %c0_12 = arith.constant 0 : index
    %c0_13 = arith.constant 0 : index
    %16 = memref.load %arg7[%c0_12, %c0_13] : memref<1x1xf32, #tpu.memory_space<smem>>
    %17 = vector.broadcast %16 : f32 to vector<16x128xf32>
    %c0_14 = arith.constant 0 : index
    %c0_15 = arith.constant 0 : index
    %c0_16 = arith.constant 0 : index
    %18 = vector.load %arg6[%c0_14, %c0_15, %c0_16] : memref<4x16x16xf32, #tpu.memory_space<vmem>>, vector<1x16x16xf32>
    %19 = vector.shape_cast %18 : vector<1x16x16xf32> to vector<16x16xf32>
    %20 = vector.extract_strided_slice %15 {offsets = [0, 0], sizes = [16, 128], strides = [1, 1]} : vector<16x512xf32> to vector<16x128xf32>
    %cst_17 = arith.constant dense<0.000000e+00> : vector<16x128xf32>
    %21 = tpu.matmul %19, %20, %cst_17 {dimension_numbers = #tpu.dot_dimension_numbers<[1], [0], [0], [1], [0, 0, 1, 1], [], []>} : vector<16x16xf32>, vector<16x128xf32>, vector<16x128xf32> -> vector<16x128xf32>
    %22 = arith.addf %17, %21 : vector<16x128xf32>
    %c1 = arith.constant 1 : index
    %c0_18 = arith.constant 0 : index
    %c0_19 = arith.constant 0 : index
    %23 = vector.load %arg6[%c1, %c0_18, %c0_19] : memref<4x16x16xf32, #tpu.memory_space<vmem>>, vector<1x16x16xf32>
    %24 = vector.shape_cast %23 : vector<1x16x16xf32> to vector<16x16xf32>
    %25 = vector.extract_strided_slice %15 {offsets = [0, 128], sizes = [16, 128], strides = [1, 1]} : vector<16x512xf32> to vector<16x128xf32>
    %cst_20 = arith.constant dense<0.000000e+00> : vector<16x128xf32>
    %26 = tpu.matmul %24, %25, %cst_20 {dimension_numbers = #tpu.dot_dimension_numbers<[1], [0], [0], [1], [0, 0, 1, 1], [], []>} : vector<16x16xf32>, vector<16x128xf32>, vector<16x128xf32> -> vector<16x128xf32>
    %27 = arith.addf %22, %26 : vector<16x128xf32>
    %c2 = arith.constant 2 : index
    %c0_21 = arith.constant 0 : index
    %c0_22 = arith.constant 0 : index
    %28 = vector.load %arg6[%c2, %c0_21, %c0_22] : memref<4x16x16xf32, #tpu.memory_space<vmem>>, vector<1x16x16xf32>
    %29 = vector.shape_cast %28 : vector<1x16x16xf32> to vector<16x16xf32>
    %30 = vector.extract_strided_slice %15 {offsets = [0, 256], sizes = [16, 128], strides = [1, 1]} : vector<16x512xf32> to vector<16x128xf32>
    %cst_23 = arith.constant dense<0.000000e+00> : vector<16x128xf32>
    %31 = tpu.matmul %29, %30, %cst_23 {dimension_numbers = #tpu.dot_dimension_numbers<[1], [0], [0], [1], [0, 0, 1, 1], [], []>} : vector<16x16xf32>, vector<16x128xf32>, vector<16x128xf32> -> vector<16x128xf32>
    %32 = arith.addf %27, %31 : vector<16x128xf32>
    %c3 = arith.constant 3 : index
    %c0_24 = arith.constant 0 : index
    %c0_25 = arith.constant 0 : index
    %33 = vector.load %arg6[%c3, %c0_24, %c0_25] : memref<4x16x16xf32, #tpu.memory_space<vmem>>, vector<1x16x16xf32>
    %34 = vector.shape_cast %33 : vector<1x16x16xf32> to vector<16x16xf32>
    %35 = vector.extract_strided_slice %15 {offsets = [0, 384], sizes = [16, 128], strides = [1, 1]} : vector<16x512xf32> to vector<16x128xf32>
    %cst_26 = arith.constant dense<0.000000e+00> : vector<16x128xf32>
    %36 = tpu.matmul %34, %35, %cst_26 {dimension_numbers = #tpu.dot_dimension_numbers<[1], [0], [0], [1], [0, 0, 1, 1], [], []>} : vector<16x16xf32>, vector<16x128xf32>, vector<16x128xf32> -> vector<16x128xf32>
    %37 = arith.addf %32, %36 : vector<16x128xf32>
    %38 = vector.shape_cast %37 : vector<16x128xf32> to vector<1x16x128xf32>
    %c0_27 = arith.constant 0 : index
    %c0_28 = arith.constant 0 : index
    %c0_29 = arith.constant 0 : index
    %39 = vector.load %arg8[%c0_27, %c0_28, %c0_29] : memref<1x16x128xf32, #tpu.memory_space<vmem>>, vector<1x16x128xf32>
    tpu.vector_store %arg8[%c0_27, %c0_28, %c0_29], %38 {strides = array<i32>} : memref<1x16x128xf32, #tpu.memory_space<vmem>>, vector<1x16x128xf32>,
    return
  }
  func.func @transform_0(%arg0: i32, %arg1: i32) -> (i32, i32, i32) {
    %c0_i32 = arith.constant 0 : i32
    %c0_i32_0 = arith.constant 0 : i32
    %c0_i32_1 = arith.constant 0 : i32
    return %arg0, %c0_i32, %c0_i32_0 : i32, i32, i32
  }
  func.func @transform_1(%arg0: i32, %arg1: i32) -> (i32, i32) {
    %c0_i32 = arith.constant 0 : i32
    %c0_i32_0 = arith.constant 0 : i32
    %c0_i32_1 = arith.constant 0 : i32
    return %c0_i32, %c0_i32_0 : i32, i32
  }
  func.func @transform_2(%arg0: i32, %arg1: i32) -> (i32, i32, i32) {
    %c0_i32 = arith.constant 0 : i32
    %c0_i32_0 = arith.constant 0 : i32
    %c0_i32_1 = arith.constant 0 : i32
    return %arg0, %c0_i32, %c0_i32_0 : i32, i32, i32
  }
  func.func @transform_3(%arg0: i32, %arg1: i32) -> (i32, i32) {
    %c0_i32 = arith.constant 0 : i32
    %c0_i32_0 = arith.constant 0 : i32
    %c0_i32_1 = arith.constant 0 : i32
    return %c0_i32, %c0_i32_0 : i32, i32
  }
  func.func @transform_4(%arg0: i32, %arg1: i32) -> (i32, i32, i32) {
    %c0_i32 = arith.constant 0 : i32
    %c0_i32_0 = arith.constant 0 : i32
    %c0_i32_1 = arith.constant 0 : i32
    %c0_i32_2 = arith.constant 0 : i32
    return %c0_i32, %c0_i32_0, %c0_i32_1 : i32, i32, i32
  }
  func.func @transform_5(%arg0: i32, %arg1: i32) -> (i32, i32) {
    %c0_i32 = arith.constant 0 : i32
    %c0_i32_0 = arith.constant 0 : i32
    %c0_i32_1 = arith.constant 0 : i32
    return %c0_i32, %c0_i32_0 : i32, i32
  }
  func.func @transform_6(%arg0: i32, %arg1: i32) -> (i32, i32, i32) {
    %c0_i32 = arith.constant 0 : i32
    %c0_i32_0 = arith.constant 0 : i32
    return %arg0, %arg1, %c0_i32 : i32, i32, i32
  }
}

</mosaic_0001>

<llo_original>
// kernel: disc_classifier_forward.1
$region0: #{disc_classifier_forward.1}
  #allocation0 [shape = 'u32[]', space=smem, size = 0x4, offset = 0x4, fixed_abs, tag = 'smem constant byte address 0x4 - core index']
  #allocation1 [shape = 'u32[144,128]{1,0:T(1,128)}', space=vmem, size = 0x12000, scoped, tag = 'internal scratch']
  #allocation2 [shape = 'f32[1,1]{1,0:T(1,128)S(6)}', space=smem, size = 0x200, scoped, tag = 'scoped memory for disc_classifier_forward.1']
  %s0 = inlined_call_operand.vmem [shape: bf16[2,16,128], index: 0, kind: input, shape index: {}]
  %s1 = inlined_call_operand.vmem [shape: bf16[128,128], index: 1, kind: input, shape index: {}]
  %s2 = inlined_call_operand.vmem [shape: f32[2,1,128], index: 2, kind: input, shape index: {}]
  %s3 = inlined_call_operand.vmem [shape: bf16[128,512], index: 3, kind: input, shape index: {}]
  %s4 = inlined_call_operand.vmem [shape: f32[4,16,16], index: 4, kind: input, shape index: {}]
  %s5 = inlined_call_operand.<no memory space> [shape: f32[1,1], index: 5, kind: input, shape index: {}]
  %s6 = inlined_call_operand.vmem [shape: f32[2,16,128], index: 6, kind: output, shape index: {}]
  %s7 = sld [smem:[#allocation0]]
  $region57: #{disc_classifier_forward.1} parent=0
    _
  %s9 = ssub.s32 1, %s7
  %s10 = scalar_select 0, %s9, %s7
  %11 = sst [smem:[#allocation2]] %s5
  loop: start=0, step=1, limit=4
  $region2: #{disc_classifier_forward.1} parent=0 // loop_pre_header
    _
  $region3: #{disc_classifier_forward.1} parent=0 // loop_header
    %s13 = sphi 0, %s17
    %p14 = scmp.ge.s32.totalorder %s13, 4
    %s20 = sphi 0, %s32
    %s21 = sphi 0, %s28
    %s22 = sphi 0, %s20
    %s23 = sphi 0, %s21
    %s24 = sphi 0, %s22
    %s25 = sphi 0, %s23
    %s35 = sphi 0, %s37
    %s38 = sphi 0, %s35
    %s39 = sphi 0, %s38
    %s55 = sphi 0, %s39
    %s59 = sphi 0, %s59
    %s61 = sphi 0, %s59
    %s62 = sphi 0, %s61
    %s76 = sphi 0, %s62
    %s82 = sphi 0, %s84
    %s85 = sphi 0, %s82
    %s86 = sphi 0, %s85
    %s102 = sphi 0, %s86
    %s106 = sphi 0, %s106
    %s108 = sphi 0, %s106
    %s109 = sphi 0, %s108
    %s123 = sphi 0, %s109
    %s127 = sphi 0, %s127
    %s129 = sphi 0, %s127
    %s130 = sphi 0, %s129
    %s144 = sphi 0, %s130
    %s148 = sphi 0, %s148
    %s150 = sphi 0, %s148
    %s151 = sphi 0, %s150
    %s165 = sphi 0, %s151
    %s173 = sphi 0, %s175
    %s176 = sphi 0, %s173
    %s177 = sphi 0, %s176
    %s193 = sphi 0, %s177
  $region4: #{disc_classifier_forward.1} parent=0 // loop_header_branch
    %16 = sbr.rel (%p14) target = $region8
  $region5: #{disc_classifier_forward.1} parent=0 // loop_body
    %s18 = ssub.s32 %s13, 1
    %s19 = ssub.s32 %s13, 2
    %s26 = sadd.s32 1, %s21
    %p27 = scmp.ge.s32.totalorder %s26, 1
    %s28 = scalar_select %p27, 0, %s26
    %s29 = sadd.s32 1, %s20
    %s30 = scalar_select %p27, %s29, %s20
    %p31 = scmp.ge.s32.totalorder %s30, 2
    %s32 = scalar_select %p31, 0, %s30
    %s33 = ssub.s32 %s20, %s32
    %p34 = scmp.eq.s32.totalorder %s33, 0
    %s36 = sadd.s32 %s35, 1
    %s37 = scalar_select %p34, %s35, %s36
    %p40 = pneg %p34
    %p41 = scmp.eq.s32.totalorder %s13, 1
    %p42 = por %p40, %p41
    %p43 = scmp.ne.s32.totalorder %s35, %s38
    %p44 = scmp.eq.s32.totalorder %s13, 0
    %p45 = por %p43, %p44
    %p46 = scmp.ne.s32.totalorder %s35, %s38
    %p47 = scmp.eq.s32.totalorder %s18, 1
    %p48 = por %p46, %p47
    %p49 = scmp.ne.s32.totalorder %s38, %s39
    %p50 = scmp.eq.s32.totalorder %s18, 0
    %p51 = por %p49, %p50
    %p52 = scmp.ne.s32.totalorder %s38, %s39
    %p53 = scmp.eq.s32.totalorder %s19, 1
    %p54 = por %p52, %p53
    %p56 = scmp.ne.s32.totalorder %s39, %s55
    %p57 = scmp.eq.s32.totalorder %s19, 0
    %p58 = por %p56, %p57
    %s60 = sadd.s32 %s59, 1
    %p63 = scmp.eq.s32.totalorder %s13, 1
    %p64 = scmp.ne.s32.totalorder %s59, %s61
    %p65 = scmp.eq.s32.totalorder %s13, 0
    %p66 = por %p64, %p65
    %p67 = scmp.ne.s32.totalorder %s59, %s61
    %p68 = scmp.eq.s32.totalorder %s18, 1
    %p69 = por %p67, %p68
    %p70 = scmp.ne.s32.totalorder %s61, %s62
    %p71 = scmp.eq.s32.totalorder %s18, 0
    %p72 = por %p70, %p71
    %p73 = scmp.ne.s32.totalorder %s61, %s62
    %p74 = scmp.eq.s32.totalorder %s19, 1
    %p75 = por %p73, %p74
    %p77 = scmp.ne.s32.totalorder %s62, %s76
    %p78 = scmp.eq.s32.totalorder %s19, 0
    %p79 = por %p77, %p78
    %s80 = ssub.s32 %s20, %s32
    %p81 = scmp.eq.s32.totalorder %s80, 0
    %s83 = sadd.s32 %s82, 1
    %s84 = scalar_select %p81, %s82, %s83
    %p87 = pneg %p81
    %p88 = scmp.eq.s32.totalorder %s13, 1
    %p89 = por %p87, %p88
    %p90 = scmp.ne.s32.totalorder %s82, %s85
    %p91 = scmp.eq.s32.totalorder %s13, 0
    %p92 = por %p90, %p91
    %p93 = scmp.ne.s32.totalorder %s82, %s85
    %p94 = scmp.eq.s32.totalorder %s18, 1
    %p95 = por %p93, %p94
    %p96 = scmp.ne.s32.totalorder %s85, %s86
    %p97 = scmp.eq.s32.totalorder %s18, 0
    %p98 = por %p96, %p97
    %p99 = scmp.ne.s32.totalorder %s85, %s86
    %p100 = scmp.eq.s32.totalorder %s19, 1
    %p101 = por %p99, %p100
    %p103 = scmp.ne.s32.totalorder %s86, %s102
    %p104 = scmp.eq.s32.totalorder %s19, 0
    %p105 = por %p103, %p104
    %s107 = sadd.s32 %s106, 1
    %p110 = scmp.eq.s32.totalorder %s13, 1
    %p111 = scmp.ne.s32.totalorder %s106, %s108
    %p112 = scmp.eq.s32.totalorder %s13, 0
    %p113 = por %p111, %p112
    %p114 = scmp.ne.s32.totalorder %s106, %s108
    %p115 = scmp.eq.s32.totalorder %s18, 1
    %p116 = por %p114, %p115
    %p117 = scmp.ne.s32.totalorder %s108, %s109
    %p118 = scmp.eq.s32.totalorder %s18, 0
    %p119 = por %p117, %p118
    %p120 = scmp.ne.s32.totalorder %s108, %s109
    %p121 = scmp.eq.s32.totalorder %s19, 1
    %p122 = por %p120, %p121
    %p124 = scmp.ne.s32.totalorder %s109, %s123
    %p125 = scmp.eq.s32.totalorder %s19, 0
    %p126 = por %p124, %p125
    %s128 = sadd.s32 %s127, 1
    %p131 = scmp.eq.s32.totalorder %s13, 1
    %p132 = scmp.ne.s32.totalorder %s127, %s129
    %p133 = scmp.eq.s32.totalorder %s13, 0
    %p134 = por %p132, %p133
    %p135 = scmp.ne.s32.totalorder %s127, %s129
    %p136 = scmp.eq.s32.totalorder %s18, 1
    %p137 = por %p135, %p136
    %p138 = scmp.ne.s32.totalorder %s129, %s130
    %p139 = scmp.eq.s32.totalorder %s18, 0
    %p140 = por %p138, %p139
    %p141 = scmp.ne.s32.totalorder %s129, %s130
    %p142 = scmp.eq.s32.totalorder %s19, 1
    %p143 = por %p141, %p142
    %p145 = scmp.ne.s32.totalorder %s130, %s144
    %p146 = scmp.eq.s32.totalorder %s19, 0
    %p147 = por %p145, %p146
    %s149 = sadd.s32 %s148, 1
    %p152 = scmp.eq.s32.totalorder %s13, 1
    %p153 = scmp.ne.s32.totalorder %s148, %s150
    %p154 = scmp.eq.s32.totalorder %s13, 0
    %p155 = por %p153, %p154
    %p156 = scmp.ne.s32.totalorder %s148, %s150
    %p157 = scmp.eq.s32.totalorder %s18, 1
    %p158 = por %p156, %p157
    %p159 = scmp.ne.s32.totalorder %s150, %s151
    %p160 = scmp.eq.s32.totalorder %s18, 0
    %p161 = por %p159, %p160
    %p162 = scmp.ne.s32.totalorder %s150, %s151
    %p163 = scmp.eq.s32.totalorder %s19, 1
    %p164 = por %p162, %p163
    %p166 = scmp.ne.s32.totalorder %s151, %s165
    %p167 = scmp.eq.s32.totalorder %s19, 0
    %p168 = por %p166, %p167
    %s169 = ssub.s32 %s20, %s32
    %s170 = ssub.s32 %s21, %s28
    %s171 = sor.u32 %s169, %s170
    %p172 = scmp.eq.s32.totalorder %s171, 0
    %s174 = sadd.s32 %s173, 1
    %s175 = scalar_select %p172, %s173, %s174
    %p178 = pneg %p172
    %p179 = scmp.eq.s32.totalorder %s13, 1
    %p180 = por %p178, %p179
    %p181 = scmp.ne.s32.totalorder %s173, %s176
    %p182 = scmp.eq.s32.totalorder %s13, 0
    %p183 = por %p181, %p182
    %p184 = scmp.ne.s32.totalorder %s173, %s176
    %p185 = scmp.eq.s32.totalorder %s18, 1
    %p186 = por %p184, %p185
    %p187 = scmp.ne.s32.totalorder %s176, %s177
    %p188 = scmp.eq.s32.totalorder %s18, 0
    %p189 = por %p187, %p188
    %p190 = scmp.ne.s32.totalorder %s176, %s177
    %p191 = scmp.eq.s32.totalorder %s19, 1
    %p192 = por %p190, %p191
    %p194 = scmp.ne.s32.totalorder %s177, %s193
    %p195 = scmp.eq.s32.totalorder %s19, 0
    %p196 = por %p194, %p195
    %p197 = scmp.le.s32.totalorder 1, %s13
    %p198 = scmp.lt.s32.totalorder %s13, 3
    %p199 = pnand %p197, %p198
    %p200 = pneg %p199
    // Predicated region
    $region9: #{disc_classifier_forward.1} parent=5 // pred_check
      _
    $region10: #{disc_classifier_forward.1} parent=5 // pred_check_branch
      %202 = sbr.rel (%p199) target = $region12
    $region11: #{disc_classifier_forward.1} parent=5 // pred_region
      %s203 = ssub.s32 %s13, 1
      // Predicated region
      $region13: #{disc_classifier_forward.1} parent=11 // pred_check
        %p204 = pneg %p72
      $region14: #{disc_classifier_forward.1} parent=11 // pred_check_branch
        %206 = sbr.rel (%p204) target = $region16
      $region15: #{disc_classifier_forward.1} parent=11 // pred_region
        _
      $region16: #{disc_classifier_forward.1} parent=11 // pred_fallthru
        _
      // Predicated region
      $region17: #{disc_classifier_forward.1} parent=11 // pred_check
        %p207 = pneg %p119
      $region18: #{disc_classifier_forward.1} parent=11 // pred_check_branch
        %209 = sbr.rel (%p207) target = $region20
      $region19: #{disc_classifier_forward.1} parent=11 // pred_region
        _
      $region20: #{disc_classifier_forward.1} parent=11 // pred_fallthru
        _
      // Predicated region
      $region21: #{disc_classifier_forward.1} parent=11 // pred_check
        %p210 = pneg %p140
      $region22: #{disc_classifier_forward.1} parent=11 // pred_check_branch
        %212 = sbr.rel (%p210) target = $region24
      $region23: #{disc_classifier_forward.1} parent=11 // pred_region
        _
      $region24: #{disc_classifier_forward.1} parent=11 // pred_fallthru
        _
      // Predicated region
      $region25: #{disc_classifier_forward.1} parent=11 // pred_check
        %p213 = pneg %p161
      $region26: #{disc_classifier_forward.1} parent=11 // pred_check_branch
        %215 = sbr.rel (%p213) target = $region28
      $region27: #{disc_classifier_forward.1} parent=11 // pred_region
        _
      $region28: #{disc_classifier_forward.1} parent=11 // pred_fallthru
        _
    $region12: #{disc_classifier_forward.1} parent=5 // pred_fallthru
      _
    %p216 = scmp.lt.s32.totalorder %s13, 2
    // Predicated region
    $region29: #{disc_classifier_forward.1} parent=5 // pred_check
      %p217 = pneg %p216
    $region30: #{disc_classifier_forward.1} parent=5 // pred_check_branch
      %219 = sbr.rel (%p217) target = $region32
    $region31: #{disc_classifier_forward.1} parent=5 // pred_region
      // Predicated region
      $region33: #{disc_classifier_forward.1} parent=31 // pred_check
        %p220 = pneg %p45
      $region34: #{disc_classifier_forward.1} parent=31 // pred_check_branch
        %222 = sbr.rel (%p220) target = $region36
      $region35: #{disc_classifier_forward.1} parent=31 // pred_region
        %p223 = scmp.lt.s32.totalorder %s20, 1
        %s224 = scalar_select %p223, %s20, 1
        %s225 = smul.addr %s224, 2
        %s226 = smul.addr %s225, 4
        %s227 = scalar_lea.vmem %s0, %s226
      $region36: #{disc_classifier_forward.1} parent=31 // pred_fallthru
        _
      // Predicated region
      $region37: #{disc_classifier_forward.1} parent=31 // pred_check
        %p228 = pneg %p92
      $region38: #{disc_classifier_forward.1} parent=31 // pred_check_branch
        %230 = sbr.rel (%p228) target = $region40
      $region39: #{disc_classifier_forward.1} parent=31 // pred_region
        %p231 = scmp.lt.s32.totalorder %s20, 1
        %s232 = scalar_select %p231, %s20, 1
        %s233 = scalar_lea.vmem %s2, %s232
      $region40: #{disc_classifier_forward.1} parent=31 // pred_fallthru
        _
    $region32: #{disc_classifier_forward.1} parent=5 // pred_fallthru
      _
    %p234 = scmp.le.s32.totalorder 1, %s13
    %p235 = scmp.lt.s32.totalorder %s13, 3
    %p236 = pnand %p234, %p235
    %p237 = pneg %p236
    // Predicated region
    $region41: #{disc_classifier_forward.1} parent=5 // pred_check
      _
    $region42: #{disc_classifier_forward.1} parent=5 // pred_check_branch
      %239 = sbr.rel (%p236) target = $region44
    $region43: #{disc_classifier_forward.1} parent=5 // pred_region
      %s240 = ssub.s32 %s13, 1
      %p241 = scmp.lt.s32.totalorder %s22, 1
      %s242 = scalar_select %p241, %s22, 1
      %s243 = smul.addr %s242, 2
      %s244 = smul.addr %s243, 4
      %s245 = scalar_lea.vmem %s0, %s244
      %p246 = pneg %p51
      %p247 = pneg %p48
      %p248 = pneg %p72
      %p249 = pneg %p69
      %p250 = scmp.lt.s32.totalorder %s22, 1
      %s251 = scalar_select %p250, %s22, 1
      %s252 = scalar_lea.vmem %s2, %s251
      %p253 = pneg %p98
      %p254 = pneg %p95
      %p255 = pneg %p119
      %p256 = pneg %p116
      %p257 = pneg %p140
      %p258 = pneg %p137
      %p259 = pneg %p161
      %p260 = pneg %p158
      %p261 = pneg %p189
      %p262 = pneg %p186
      %s263 = smul.u32 2, %s23
      %p264 = scmp.lt.s32.totalorder %s22, 1
      %s265 = scalar_select %p264, %s22, 1
      %p266 = scmp.lt.s32.totalorder %s263, 1
      %s267 = scalar_select %p266, %s263, 1
      %s268 = smul.addr %s265, 2
      %s269 = sadd.s32 %s267, %s268
      %s270 = smul.addr %s269, 8
      %s271 = scalar_lea.vmem %s6, %s270
      %p272 = scmp.lt.s32.totalorder %s22, 1
      %s273 = scalar_select %p272, %s22, 1
      %s274 = smul.addr %s273, 2
      %s275 = smul.addr %s274, 4
      %s276 = scalar_lea.vmem %s0, %s275
      %p277 = scmp.lt.s32.totalorder %s22, 1
      %s278 = scalar_select %p277, %s22, 1
      %s279 = scalar_lea.vmem %s2, %s278
      %s280 = smul.u32 2, %s23
      %p281 = scmp.lt.s32.totalorder %s22, 1
      %s282 = scalar_select %p281, %s22, 1
      %p283 = scmp.lt.s32.totalorder %s280, 1
      %s284 = scalar_select %p283, %s280, 1
      %s285 = smul.addr %s282, 2
      %s286 = sadd.s32 %s284, %s285
      %s287 = smul.addr %s286, 8
      %s288 = scalar_lea.vmem %s6, %s287
      %s289 = smul.u32 2, %s23
      %v291 = vld [vmem:[%s276] sm:$0xf]
      %v292 = vld [vmem:[%s276 + $0x4] sm:$0xf]
      %v293 = vld [vmem:[%s1] sm:$0xf]
      %v294 = vld [vmem:[%s1 + $0x4] sm:$0xf]
      %v295 = vld [vmem:[%s1 + $0x8] sm:$0xf]
      %v296 = vld [vmem:[%s1 + $0xc] sm:$0xf]
      %v297 = vld [vmem:[%s1 + $0x10] sm:$0xf]
      %v298 = vld [vmem:[%s1 + $0x14] sm:$0xf]
      %v299 = vld [vmem:[%s1 + $0x18] sm:$0xf]
      %v300 = vld [vmem:[%s1 + $0x1c] sm:$0xf]
      %v301 = vld [vmem:[%s1 + $0x20] sm:$0xf]
      %v302 = vld [vmem:[%s1 + $0x24] sm:$0xf]
      %v303 = vld [vmem:[%s1 + $0x28] sm:$0xf]
      %v304 = vld [vmem:[%s1 + $0x2c] sm:$0xf]
      %v305 = vld [vmem:[%s1 + $0x30] sm:$0xf]
      %v306 = vld [vmem:[%s1 + $0x34] sm:$0xf]
      %v307 = vld [vmem:[%s1 + $0x38] sm:$0xf]
      %v308 = vld [vmem:[%s1 + $0x3c] sm:$0xf]
      %v309 = vld [vmem:[%s279] sm:$0x1]
      %v311 = vlaneseq
      %v312 = vshrl.u32 %v311, 7
      %v313 = vsub.s32 0, %v312
      %v314 = vrot.slane %v309, %v313
      %v318 = vunpack.c.l.b16 %v291
      %v319 = vunpack.c.l.b16 %v292
      %v320 = vpack.c.b16 %v319, %v318
      %v338 = vunpack.c.l.b16 %v293
      %v339 = vunpack.c.l.b16 %v294
      %v340 = vunpack.c.l.b16 %v295
      %v341 = vunpack.c.l.b16 %v296
      %v342 = vunpack.c.l.b16 %v297
      %v343 = vunpack.c.l.b16 %v298
      %v344 = vunpack.c.l.b16 %v299
      %v345 = vunpack.c.l.b16 %v300
      %v346 = vunpack.c.l.b16 %v301
      %v347 = vunpack.c.l.b16 %v302
      %v348 = vunpack.c.l.b16 %v303
      %v349 = vunpack.c.l.b16 %v304
      %v350 = vunpack.c.l.b16 %v305
      %v351 = vunpack.c.l.b16 %v306
      %v352 = vunpack.c.l.b16 %v307
      %v353 = vunpack.c.l.b16 %v308
      %v354 = vpack.c.b16 %v339, %v338
      %v355 = vpack.c.b16 %v341, %v340
      %v356 = vpack.c.b16 %v343, %v342
      %v357 = vpack.c.b16 %v345, %v344
      %v358 = vpack.c.b16 %v347, %v346
      %v359 = vpack.c.b16 %v349, %v348
      %v360 = vpack.c.b16 %v351, %v350
      %v361 = vpack.c.b16 %v353, %v352
      %370 = vmatprep.subr.bf16.mxu0 0
      %371 = vmatpush1.bf16.msra.mxu0 %v354
      %372 = vmatprep.subr.bf16.mxu0 0
      %373 = vmatpush1.bf16.msra.mxu0 %v355
      %374 = vmatprep.subr.bf16.mxu0 0
      %375 = vmatpush1.bf16.msra.mxu0 %v356
      %376 = vmatprep.subr.bf16.mxu0 0
      %377 = vmatpush1.bf16.msra.mxu0 %v357
      %378 = vmatprep.subr.bf16.mxu0 0
      %379 = vmatpush1.bf16.msra.mxu0 %v358
      %380 = vmatprep.subr.bf16.mxu0 0
      %381 = vmatpush1.bf16.msra.mxu0 %v359
      %382 = vmatprep.subr.bf16.mxu0 0
      %383 = vmatpush1.bf16.msra.mxu0 %v360
      %384 = vmatprep.subr.bf16.mxu0 0
      %385 = vmatpush1.bf16.msra.mxu0 %v361
      %386 = vmatprep.subr.bf16.mxu0 0
      %387 = vmatpush1.bf16.msra.mxu0 0
      %388 = vmatprep.subr.bf16.mxu0 0
      %389 = vmatpush1.bf16.msra.mxu0 0
      %390 = vmatprep.subr.bf16.mxu0 0
      %391 = vmatpush1.bf16.msra.mxu0 0
      %392 = vmatprep.subr.bf16.mxu0 0
      %393 = vmatpush1.bf16.msra.mxu0 0
      %394 = vmatprep.subr.bf16.mxu0 0
      %395 = vmatpush1.bf16.msra.mxu0 0
      %396 = vmatprep.subr.bf16.mxu0 0
      %397 = vmatpush1.bf16.msra.mxu0 0
      %398 = vmatprep.subr.bf16.mxu0 0
      %399 = vmatpush1.bf16.msra.mxu0 0
      %400 = vmatprep.subr.bf16.mxu0 0
      %401 = vmatpush1.bf16.msra.mxu0 0
      %402 = vmatprep.mubr.bf16.mxu0 0
      %403 = vmatmul.mubr.bf16.gmra.mrb[0].mxu0 %v320
      %v404 = vpop.f32.mrb[0].mxu0
      %v405 = vadd.f32 %v314, %v404
      %v406 = vpop.f32.mrb[0].mxu0
      %v407 = vpop.f32.mrb[0].mxu0
      %v408 = vadd.f32 %v314, %v407
      %v409 = vpop.f32.mrb[0].mxu0
      %410 = vdwg.mxu0
      %vm411 = vcmp.gt.f32.partialorder %v405, 0.0
      %vm412 = vcmp.gt.f32.partialorder %v408, 0.0
      %v413 = vmul.f32 %v405, 0.2
      %v414 = vmul.f32 %v408, 0.2
      %v415 = vsel %vm411, %v405, %v413
      %v416 = vsel %vm412, %v408, %v414
      %v417 = vpack.c.bf16 %v416, %v415
      %v418 = vld [vmem:[%s3] sm:$0xff]
      %v419 = vld [vmem:[%s3 + $0x8] sm:$0xff]
      %v420 = vld [vmem:[%s3 + $0x10] sm:$0xff]
      %v421 = vld [vmem:[%s3 + $0x18] sm:$0xff]
      %v422 = vld [vmem:[%s3 + $0x20] sm:$0xff]
      %v423 = vld [vmem:[%s3 + $0x28] sm:$0xff]
      %v424 = vld [vmem:[%s3 + $0x30] sm:$0xff]
      %v425 = vld [vmem:[%s3 + $0x38] sm:$0xff]
      %v426 = vld [vmem:[%s3 + $0x40] sm:$0xff]
      %v427 = vld [vmem:[%s3 + $0x48] sm:$0xff]
      %v428 = vld [vmem:[%s3 + $0x50] sm:$0xff]
      %v429 = vld [vmem:[%s3 + $0x58] sm:$0xff]
      %v430 = vld [vmem:[%s3 + $0x60] sm:$0xff]
      %v431 = vld [vmem:[%s3 + $0x68] sm:$0xff]
      %v432 = vld [vmem:[%s3 + $0x70] sm:$0xff]
      %v433 = vld [vmem:[%s3 + $0x78] sm:$0xff]
      %v434 = vld [vmem:[%s3 + $0x80] sm:$0xff]
      %v435 = vld [vmem:[%s3 + $0x88] sm:$0xff]
      %v436 = vld [vmem:[%s3 + $0x90] sm:$0xff]
      %v437 = vld [vmem:[%s3 + $0x98] sm:$0xff]
      %v438 = vld [vmem:[%s3 + $0xa0] sm:$0xff]
      %v439 = vld [vmem:[%s3 + $0xa8] sm:$0xff]
      %v440 = vld [vmem:[%s3 + $0xb0] sm:$0xff]
      %v441 = vld [vmem:[%s3 + $0xb8] sm:$0xff]
      %v442 = vld [vmem:[%s3 + $0xc0] sm:$0xff]
      %v443 = vld [vmem:[%s3 + $0xc8] sm:$0xff]
      %v444 = vld [vmem:[%s3 + $0xd0] sm:$0xff]
      %v445 = vld [vmem:[%s3 + $0xd8] sm:$0xff]
      %v446 = vld [vmem:[%s3 + $0xe0] sm:$0xff]
      %v447 = vld [vmem:[%s3 + $0xe8] sm:$0xff]
      %v448 = vld [vmem:[%s3 + $0xf0] sm:$0xff]
      %v449 = vld [vmem:[%s3 + $0xf8] sm:$0xff]
      %v482 = vunpack.c.l.b16 %v418
      %v483 = vunpack.c.h.b16 %v418
      %v484 = vunpack.c.l.b16 %v419
      %v485 = vunpack.c.h.b16 %v419
      %v486 = vunpack.c.l.b16 %v420
      %v487 = vunpack.c.h.b16 %v420
      %v488 = vunpack.c.l.b16 %v421
      %v489 = vunpack.c.h.b16 %v421
      %v490 = vunpack.c.l.b16 %v422
      %v491 = vunpack.c.h.b16 %v422
      %v492 = vunpack.c.l.b16 %v423
      %v493 = vunpack.c.h.b16 %v423
      %v494 = vunpack.c.l.b16 %v424
      %v495 = vunpack.c.h.b16 %v424
      %v496 = vunpack.c.l.b16 %v425
      %v497 = vunpack.c.h.b16 %v425
      %v498 = vunpack.c.l.b16 %v426
      %v499 = vunpack.c.h.b16 %v426
      %v500 = vunpack.c.l.b16 %v427
      %v501 = vunpack.c.h.b16 %v427
      %v502 = vunpack.c.l.b16 %v428
      %v503 = vunpack.c.h.b16 %v428
      %v504 = vunpack.c.l.b16 %v429
      %v505 = vunpack.c.h.b16 %v429
      %v506 = vunpack.c.l.b16 %v430
      %v507 = vunpack.c.h.b16 %v430
      %v508 = vunpack.c.l.b16 %v431
      %v509 = vunpack.c.h.b16 %v431
      %v510 = vunpack.c.l.b16 %v432
      %v511 = vunpack.c.h.b16 %v432
      %v512 = vunpack.c.l.b16 %v433
      %v513 = vunpack.c.h.b16 %v433
      %v514 = vunpack.c.l.b16 %v434
      %v515 = vunpack.c.h.b16 %v434
      %v516 = vunpack.c.l.b16 %v435
      %v517 = vunpack.c.h.b16 %v435
      %v518 = vunpack.c.l.b16 %v436
      %v519 = vunpack.c.h.b16 %v436
      %v520 = vunpack.c.l.b16 %v437
      %v521 = vunpack.c.h.b16 %v437
      %v522 = vunpack.c.l.b16 %v438
      %v523 = vunpack.c.h.b16 %v438
      %v524 = vunpack.c.l.b16 %v439
      %v525 = vunpack.c.h.b16 %v439
      %v526 = vunpack.c.l.b16 %v440
      %v527 = vunpack.c.h.b16 %v440
      %v528 = vunpack.c.l.b16 %v441
      %v529 = vunpack.c.h.b16 %v441
      %v530 = vunpack.c.l.b16 %v442
      %v531 = vunpack.c.h.b16 %v442
      %v532 = vunpack.c.l.b16 %v443
      %v533 = vunpack.c.h.b16 %v443
      %v534 = vunpack.c.l.b16 %v444
      %v535 = vunpack.c.h.b16 %v444
      %v536 = vunpack.c.l.b16 %v445
      %v537 = vunpack.c.h.b16 %v445
      %v538 = vunpack.c.l.b16 %v446
      %v539 = vunpack.c.h.b16 %v446
      %v540 = vunpack.c.l.b16 %v447
      %v541 = vunpack.c.h.b16 %v447
      %v542 = vunpack.c.l.b16 %v448
      %v543 = vunpack.c.h.b16 %v448
      %v544 = vunpack.c.l.b16 %v449
      %v545 = vunpack.c.h.b16 %v449
      %v546 = vpack.c.b16 %v486, %v482
      %v547 = vpack.c.b16 %v487, %v483
      %v548 = vpack.c.b16 %v488, %v484
      %v549 = vpack.c.b16 %v489, %v485
      %v550 = vpack.c.b16 %v494, %v490
      %v551 = vpack.c.b16 %v495, %v491
      %v552 = vpack.c.b16 %v496, %v492
      %v553 = vpack.c.b16 %v497, %v493
      %v554 = vpack.c.b16 %v502, %v498
      %v555 = vpack.c.b16 %v503, %v499
      %v556 = vpack.c.b16 %v504, %v500
      %v557 = vpack.c.b16 %v505, %v501
      %v558 = vpack.c.b16 %v510, %v506
      %v559 = vpack.c.b16 %v511, %v507
      %v560 = vpack.c.b16 %v512, %v508
      %v561 = vpack.c.b16 %v513, %v509
      %v562 = vpack.c.b16 %v518, %v514
      %v563 = vpack.c.b16 %v519, %v515
      %v564 = vpack.c.b16 %v520, %v516
      %v565 = vpack.c.b16 %v521, %v517
      %v566 = vpack.c.b16 %v526, %v522
      %v567 = vpack.c.b16 %v527, %v523
      %v568 = vpack.c.b16 %v528, %v524
      %v569 = vpack.c.b16 %v529, %v525
      %v570 = vpack.c.b16 %v534, %v530
      %v571 = vpack.c.b16 %v535, %v531
      %v572 = vpack.c.b16 %v536, %v532
      %v573 = vpack.c.b16 %v537, %v533
      %v574 = vpack.c.b16 %v542, %v538
      %v575 = vpack.c.b16 %v543, %v539
      %v576 = vpack.c.b16 %v544, %v540
      %v577 = vpack.c.b16 %v545, %v541
      %610 = vmatprep.subr.bf16.mxu0 %v547
      %611 = vmatpush1.bf16.msra.mxu0 %v546
      %612 = vmatprep.subr.bf16.mxu0 %v551
      %613 = vmatpush1.bf16.msra.mxu0 %v550
      %614 = vmatprep.subr.bf16.mxu0 %v555
      %615 = vmatpush1.bf16.msra.mxu0 %v554
      %616 = vmatprep.subr.bf16.mxu0 %v559
      %617 = vmatpush1.bf16.msra.mxu0 %v558
      %618 = vmatprep.subr.bf16.mxu0 %v563
      %619 = vmatpush1.bf16.msra.mxu0 %v562
      %620 = vmatprep.subr.bf16.mxu0 %v567
      %621 = vmatpush1.bf16.msra.mxu0 %v566
      %622 = vmatprep.subr.bf16.mxu0 %v571
      %623 = vmatpush1.bf16.msra.mxu0 %v570
      %624 = vmatprep.subr.bf16.mxu0 %v575
      %625 = vmatpush1.bf16.msra.mxu0 %v574
      %626 = vmatprep.subr.bf16.mxu0 0
      %627 = vmatpush1.bf16.msra.mxu0 0
      %628 = vmatprep.subr.bf16.mxu0 0
      %629 = vmatpush1.bf16.msra.mxu0 0
      %630 = vmatprep.subr.bf16.mxu0 0
      %631 = vmatpush1.bf16.msra.mxu0 0
      %632 = vmatprep.subr.bf16.mxu0 0
      %633 = vmatpush1.bf16.msra.mxu0 0
      %634 = vmatprep.subr.bf16.mxu0 0
      %635 = vmatpush1.bf16.msra.mxu0 0
      %636 = vmatprep.subr.bf16.mxu0 0
      %637 = vmatpush1.bf16.msra.mxu0 0
      %638 = vmatprep.subr.bf16.mxu0 0
      %639 = vmatpush1.bf16.msra.mxu0 0
      %640 = vmatprep.subr.bf16.mxu0 0
      %641 = vmatpush1.bf16.msra.mxu0 0
      %642 = vmatprep.mubr.bf16.mxu0 0
      %643 = vmatmul.mubr.bf16.gmra.mrb[0].mxu0 %v417
      %v644 = vpop.f32.mrb[0].mxu0
      %v645 = vadd.f32 0.0, %v644
      %v646 = vpop.f32.mrb[0].mxu0
      %v647 = vadd.f32 0.0, %v646
      %v648 = vpop.f32.mrb[0].mxu0
      %v649 = vadd.f32 0.0, %v648
      %v650 = vpop.f32.mrb[0].mxu0
      %v651 = vadd.f32 0.0, %v650
      %652 = vdwg.mxu0
      %653 = vmatprep.subr.bf16.mxu0 %v549
      %654 = vmatpush1.bf16.msra.mxu0 %v548
      %655 = vmatprep.subr.bf16.mxu0 %v553
      %656 = vmatpush1.bf16.msra.mxu0 %v552
      %657 = vmatprep.subr.bf16.mxu0 %v557
      %658 = vmatpush1.bf16.msra.mxu0 %v556
      %659 = vmatprep.subr.bf16.mxu0 %v561
      %660 = vmatpush1.bf16.msra.mxu0 %v560
      %661 = vmatprep.subr.bf16.mxu0 %v565
      %662 = vmatpush1.bf16.msra.mxu0 %v564
      %663 = vmatprep.subr.bf16.mxu0 %v569
      %664 = vmatpush1.bf16.msra.mxu0 %v568
      %665 = vmatprep.subr.bf16.mxu0 %v573
      %666 = vmatpush1.bf16.msra.mxu0 %v572
      %667 = vmatprep.subr.bf16.mxu0 %v577
      %668 = vmatpush1.bf16.msra.mxu0 %v576
      %669 = vmatprep.subr.bf16.mxu0 0
      %670 = vmatpush1.bf16.msra.mxu0 0
      %671 = vmatprep.subr.bf16.mxu0 0
      %672 = vmatpush1.bf16.msra.mxu0 0
      %673 = vmatprep.subr.bf16.mxu0 0
      %674 = vmatpush1.bf16.msra.mxu0 0
      %675 = vmatprep.subr.bf16.mxu0 0
      %676 = vmatpush1.bf16.msra.mxu0 0
      %677 = vmatprep.subr.bf16.mxu0 0
      %678 = vmatpush1.bf16.msra.mxu0 0
      %679 = vmatprep.subr.bf16.mxu0 0
      %680 = vmatpush1.bf16.msra.mxu0 0
      %681 = vmatprep.subr.bf16.mxu0 0
      %682 = vmatpush1.bf16.msra.mxu0 0
      %683 = vmatprep.subr.bf16.mxu0 0
      %684 = vmatpush1.bf16.msra.mxu0 0
      %685 = vmatprep.mubr.bf16.mxu0 0
      %686 = vmatmul.mubr.bf16.gmra.mrb[0].mxu0 %v417
      %v687 = vpop.f32.mrb[0].mxu0
      %v688 = vadd.f32 0.0, %v687
      %v689 = vpop.f32.mrb[0].mxu0
      %v690 = vadd.f32 0.0, %v689
      %v691 = vpop.f32.mrb[0].mxu0
      %v692 = vadd.f32 0.0, %v691
      %v693 = vpop.f32.mrb[0].mxu0
      %v694 = vadd.f32 0.0, %v693
      %695 = vdwg.mxu0
      %s696 = sld [smem:[#allocation2]]
      %v697 = vstv %s696
      %v698 = vld [vmem:[%s4] sm:$0xff]
      %v699 = vld [vmem:[%s4 + $0x8] sm:$0xff]
      %vm700 = vcmask 130048
      %v702 = vsel %vm700, %v698, 0
      %v705 = vsel %vm700, %v699, 0
      %707 = vmatprep.subr.mxu0 0.0
      %708 = vmatpush1.msra.mxu0 %v645
      %709 = vmatprep.subr.mxu0 0.0
      %710 = vmatpush1.msra.mxu0 %v649
      %711 = vmatprep.subr.mxu0 0.0
      %712 = vmatpush1.msra.mxu0 0.0
      %713 = vmatprep.subr.mxu0 0.0
      %714 = vmatpush1.msra.mxu0 0.0
      %715 = vmatprep.subr.mxu0 0.0
      %716 = vmatpush1.msra.mxu0 0.0
      %717 = vmatprep.subr.mxu0 0.0
      %718 = vmatpush1.msra.mxu0 0.0
      %719 = vmatprep.subr.mxu0 0.0
      %720 = vmatpush1.msra.mxu0 0.0
      %721 = vmatprep.subr.mxu0 0.0
      %722 = vmatpush1.msra.mxu0 0.0
      %723 = vmatprep.subr.mxu0 0.0
      %724 = vmatpush1.msra.mxu0 0.0
      %725 = vmatprep.subr.mxu0 0.0
      %726 = vmatpush1.msra.mxu0 0.0
      %727 = vmatprep.subr.mxu0 0.0
      %728 = vmatpush1.msra.mxu0 0.0
      %729 = vmatprep.subr.mxu0 0.0
      %730 = vmatpush1.msra.mxu0 0.0
      %731 = vmatprep.subr.mxu0 0.0
      %732 = vmatpush1.msra.mxu0 0.0
      %733 = vmatprep.subr.mxu0 0.0
      %734 = vmatpush1.msra.mxu0 0.0
      %735 = vmatprep.subr.mxu0 0.0
      %736 = vmatpush1.msra.mxu0 0.0
      %737 = vmatprep.subr.mxu0 0.0
      %738 = vmatpush1.msra.mxu0 0.0
      %739 = vmatprep.subr.mxu0 0.0
      %740 = vmatpush1.msra.mxu0 0.0
      %741 = vmatprep.subr.mxu0 0.0
      %742 = vmatpush1.msra.mxu0 0.0
      %743 = vmatprep.subr.mxu0 0.0
      %744 = vmatpush1.msra.mxu0 0.0
      %745 = vmatprep.subr.mxu0 0.0
      %746 = vmatpush1.msra.mxu0 0.0
      %747 = vmatprep.subr.mxu0 0.0
      %748 = vmatpush1.msra.mxu0 0.0
      %749 = vmatprep.subr.mxu0 0.0
      %750 = vmatpush1.msra.mxu0 0.0
      %751 = vmatprep.subr.mxu0 0.0
      %752 = vmatpush1.msra.mxu0 0.0
      %753 = vmatprep.subr.mxu0 0.0
      %754 = vmatpush1.msra.mxu0 0.0
      %755 = vmatprep.subr.mxu0 0.0
      %756 = vmatpush1.msra.mxu0 0.0
      %757 = vmatprep.subr.mxu0 0.0
      %758 = vmatpush1.msra.mxu0 0.0
      %759 = vmatprep.subr.mxu0 0.0
      %760 = vmatpush1.msra.mxu0 0.0
      %761 = vmatprep.subr.mxu0 0.0
      %762 = vmatpush1.msra.mxu0 0.0
      %763 = vmatprep.subr.mxu0 0.0
      %764 = vmatpush1.msra.mxu0 0.0
      %765 = vmatprep.subr.mxu0 0.0
      %766 = vmatpush1.msra.mxu0 0.0
      %767 = vmatprep.subr.mxu0 0.0
      %768 = vmatpush1.msra.mxu0 0.0
      %769 = vmatprep.subr.mxu0 0.0
      %770 = vmatpush1.msra.mxu0 0.0
      %771 = vmatprep.mubr.f32.mxu0 0.0
      %772 = vmatmul.mubr.f32.gmra.mrb[0].mxu0 %v702
      %v773 = vpop.f32.mrb[0].mxu0
      %v774 = vadd.f32 0.0, %v773
      %v775 = vpop.f32.mrb[0].mxu0
      %776 = vmatprep.mubr.f32.mxu0 0.0
      %777 = vmatmul.mubr.f32.gmra.mrb[0].mxu0 %v705
      %v778 = vpop.f32.mrb[0].mxu0
      %v779 = vadd.f32 0.0, %v778
      %v780 = vpop.f32.mrb[0].mxu0
      %781 = vdwg.mxu0
      %v782 = vadd.f32 %v697, %v774
      %v783 = vadd.f32 %v697, %v779
      %s784 = scalar_lea.vmem %s4, 16
      %v785 = vld [vmem:[%s784] sm:$0xff]
      %v786 = vld [vmem:[%s784 + $0x8] sm:$0xff]
      %v788 = vsel %vm700, %v785, 0
      %v791 = vsel %vm700, %v786, 0
      %793 = vmatprep.subr.mxu0 0.0
      %794 = vmatpush1.msra.mxu0 %v647
      %795 = vmatprep.subr.mxu0 0.0
      %796 = vmatpush1.msra.mxu0 %v651
      %797 = vmatprep.subr.mxu0 0.0
      %798 = vmatpush1.msra.mxu0 0.0
      %799 = vmatprep.subr.mxu0 0.0
      %800 = vmatpush1.msra.mxu0 0.0
      %801 = vmatprep.subr.mxu0 0.0
      %802 = vmatpush1.msra.mxu0 0.0
      %803 = vmatprep.subr.mxu0 0.0
      %804 = vmatpush1.msra.mxu0 0.0
      %805 = vmatprep.subr.mxu0 0.0
      %806 = vmatpush1.msra.mxu0 0.0
      %807 = vmatprep.subr.mxu0 0.0
      %808 = vmatpush1.msra.mxu0 0.0
      %809 = vmatprep.subr.mxu0 0.0
      %810 = vmatpush1.msra.mxu0 0.0
      %811 = vmatprep.subr.mxu0 0.0
      %812 = vmatpush1.msra.mxu0 0.0
      %813 = vmatprep.subr.mxu0 0.0
      %814 = vmatpush1.msra.mxu0 0.0
      %815 = vmatprep.subr.mxu0 0.0
      %816 = vmatpush1.msra.mxu0 0.0
      %817 = vmatprep.subr.mxu0 0.0
      %818 = vmatpush1.msra.mxu0 0.0
      %819 = vmatprep.subr.mxu0 0.0
      %820 = vmatpush1.msra.mxu0 0.0
      %821 = vmatprep.subr.mxu0 0.0
      %822 = vmatpush1.msra.mxu0 0.0
      %823 = vmatprep.subr.mxu0 0.0
      %824 = vmatpush1.msra.mxu0 0.0
      %825 = vmatprep.subr.mxu0 0.0
      %826 = vmatpush1.msra.mxu0 0.0
      %827 = vmatprep.subr.mxu0 0.0
      %828 = vmatpush1.msra.mxu0 0.0
      %829 = vmatprep.subr.mxu0 0.0
      %830 = vmatpush1.msra.mxu0 0.0
      %831 = vmatprep.subr.mxu0 0.0
      %832 = vmatpush1.msra.mxu0 0.0
      %833 = vmatprep.subr.mxu0 0.0
      %834 = vmatpush1.msra.mxu0 0.0
      %835 = vmatprep.subr.mxu0 0.0
      %836 = vmatpush1.msra.mxu0 0.0
      %837 = vmatprep.subr.mxu0 0.0
      %838 = vmatpush1.msra.mxu0 0.0
      %839 = vmatprep.subr.mxu0 0.0
      %840 = vmatpush1.msra.mxu0 0.0
      %841 = vmatprep.subr.mxu0 0.0
      %842 = vmatpush1.msra.mxu0 0.0
      %843 = vmatprep.subr.mxu0 0.0
      %844 = vmatpush1.msra.mxu0 0.0
      %845 = vmatprep.subr.mxu0 0.0
      %846 = vmatpush1.msra.mxu0 0.0
      %847 = vmatprep.subr.mxu0 0.0
      %848 = vmatpush1.msra.mxu0 0.0
      %849 = vmatprep.subr.mxu0 0.0
      %850 = vmatpush1.msra.mxu0 0.0
      %851 = vmatprep.subr.mxu0 0.0
      %852 = vmatpush1.msra.mxu0 0.0
      %853 = vmatprep.subr.mxu0 0.0
      %854 = vmatpush1.msra.mxu0 0.0
      %855 = vmatprep.subr.mxu0 0.0
      %856 = vmatpush1.msra.mxu0 0.0
      %857 = vmatprep.mubr.f32.mxu0 0.0
      %858 = vmatmul.mubr.f32.gmra.mrb[0].mxu0 %v788
      %v859 = vpop.f32.mrb[0].mxu0
      %v860 = vadd.f32 0.0, %v859
      %v861 = vpop.f32.mrb[0].mxu0
      %862 = vmatprep.mubr.f32.mxu0 0.0
      %863 = vmatmul.mubr.f32.gmra.mrb[0].mxu0 %v791
      %v864 = vpop.f32.mrb[0].mxu0
      %v865 = vadd.f32 0.0, %v864
      %v866 = vpop.f32.mrb[0].mxu0
      %867 = vdwg.mxu0
      %v868 = vadd.f32 %v782, %v860
      %v869 = vadd.f32 %v783, %v865
      %s870 = scalar_lea.vmem %s4, 32
      %v871 = vld [vmem:[%s870] sm:$0xff]
      %v872 = vld [vmem:[%s870 + $0x8] sm:$0xff]
      %v874 = vsel %vm700, %v871, 0
      %v877 = vsel %vm700, %v872, 0
      %879 = vmatprep.subr.mxu0 0.0
      %880 = vmatpush1.msra.mxu0 %v688
      %881 = vmatprep.subr.mxu0 0.0
      %882 = vmatpush1.msra.mxu0 %v692
      %883 = vmatprep.subr.mxu0 0.0
      %884 = vmatpush1.msra.mxu0 0.0
      %885 = vmatprep.subr.mxu0 0.0
      %886 = vmatpush1.msra.mxu0 0.0
      %887 = vmatprep.subr.mxu0 0.0
      %888 = vmatpush1.msra.mxu0 0.0
      %889 = vmatprep.subr.mxu0 0.0
      %890 = vmatpush1.msra.mxu0 0.0
      %891 = vmatprep.subr.mxu0 0.0
      %892 = vmatpush1.msra.mxu0 0.0
      %893 = vmatprep.subr.mxu0 0.0
      %894 = vmatpush1.msra.mxu0 0.0
      %895 = vmatprep.subr.mxu0 0.0
      %896 = vmatpush1.msra.mxu0 0.0
      %897 = vmatprep.subr.mxu0 0.0
      %898 = vmatpush1.msra.mxu0 0.0
      %899 = vmatprep.subr.mxu0 0.0
      %900 = vmatpush1.msra.mxu0 0.0
      %901 = vmatprep.subr.mxu0 0.0
      %902 = vmatpush1.msra.mxu0 0.0
      %903 = vmatprep.subr.mxu0 0.0
      %904 = vmatpush1.msra.mxu0 0.0
      %905 = vmatprep.subr.mxu0 0.0
      %906 = vmatpush1.msra.mxu0 0.0
      %907 = vmatprep.subr.mxu0 0.0
      %908 = vmatpush1.msra.mxu0 0.0
      %909 = vmatprep.subr.mxu0 0.0
      %910 = vmatpush1.msra.mxu0 0.0
      %911 = vmatprep.subr.mxu0 0.0
      %912 = vmatpush1.msra.mxu0 0.0
      %913 = vmatprep.subr.mxu0 0.0
      %914 = vmatpush1.msra.mxu0 0.0
      %915 = vmatprep.subr.mxu0 0.0
      %916 = vmatpush1.msra.mxu0 0.0
      %917 = vmatprep.subr.mxu0 0.0
      %918 = vmatpush1.msra.mxu0 0.0
      %919 = vmatprep.subr.mxu0 0.0
      %920 = vmatpush1.msra.mxu0 0.0
      %921 = vmatprep.subr.mxu0 0.0
      %922 = vmatpush1.msra.mxu0 0.0
      %923 = vmatprep.subr.mxu0 0.0
      %924 = vmatpush1.msra.mxu0 0.0
      %925 = vmatprep.subr.mxu0 0.0
      %926 = vmatpush1.msra.mxu0 0.0
      %927 = vmatprep.subr.mxu0 0.0
      %928 = vmatpush1.msra.mxu0 0.0
      %929 = vmatprep.subr.mxu0 0.0
      %930 = vmatpush1.msra.mxu0 0.0
      %931 = vmatprep.subr.mxu0 0.0
      %932 = vmatpush1.msra.mxu0 0.0
      %933 = vmatprep.subr.mxu0 0.0
      %934 = vmatpush1.msra.mxu0 0.0
      %935 = vmatprep.subr.mxu0 0.0
      %936 = vmatpush1.msra.mxu0 0.0
      %937 = vmatprep.subr.mxu0 0.0
      %938 = vmatpush1.msra.mxu0 0.0
      %939 = vmatprep.subr.mxu0 0.0
      %940 = vmatpush1.msra.mxu0 0.0
      %941 = vmatprep.subr.mxu0 0.0
      %942 = vmatpush1.msra.mxu0 0.0
      %943 = vmatprep.mubr.f32.mxu0 0.0
      %944 = vmatmul.mubr.f32.gmra.mrb[0].mxu0 %v874
      %v945 = vpop.f32.mrb[0].mxu0
      %v946 = vadd.f32 0.0, %v945
      %v947 = vpop.f32.mrb[0].mxu0
      %948 = vmatprep.mubr.f32.mxu0 0.0
      %949 = vmatmul.mubr.f32.gmra.mrb[0].mxu0 %v877
      %v950 = vpop.f32.mrb[0].mxu0
      %v951 = vadd.f32 0.0, %v950
      %v952 = vpop.f32.mrb[0].mxu0
      %953 = vdwg.mxu0
      %v954 = vadd.f32 %v868, %v946
      %v955 = vadd.f32 %v869, %v951
      %s956 = scalar_lea.vmem %s4, 48
      %v957 = vld [vmem:[%s956] sm:$0xff]
      %v958 = vld [vmem:[%s956 + $0x8] sm:$0xff]
      %v960 = vsel %vm700, %v957, 0
      %v963 = vsel %vm700, %v958, 0
      %965 = vmatprep.subr.mxu0 0.0
      %966 = vmatpush1.msra.mxu0 %v690
      %967 = vmatprep.subr.mxu0 0.0
      %968 = vmatpush1.msra.mxu0 %v694
      %969 = vmatprep.subr.mxu0 0.0
      %970 = vmatpush1.msra.mxu0 0.0
      %971 = vmatprep.subr.mxu0 0.0
      %972 = vmatpush1.msra.mxu0 0.0
      %973 = vmatprep.subr.mxu0 0.0
      %974 = vmatpush1.msra.mxu0 0.0
      %975 = vmatprep.subr.mxu0 0.0
      %976 = vmatpush1.msra.mxu0 0.0
      %977 = vmatprep.subr.mxu0 0.0
      %978 = vmatpush1.msra.mxu0 0.0
      %979 = vmatprep.subr.mxu0 0.0
      %980 = vmatpush1.msra.mxu0 0.0
      %981 = vmatprep.subr.mxu0 0.0
      %982 = vmatpush1.msra.mxu0 0.0
      %983 = vmatprep.subr.mxu0 0.0
      %984 = vmatpush1.msra.mxu0 0.0
      %985 = vmatprep.subr.mxu0 0.0
      %986 = vmatpush1.msra.mxu0 0.0
      %987 = vmatprep.subr.mxu0 0.0
      %988 = vmatpush1.msra.mxu0 0.0
      %989 = vmatprep.subr.mxu0 0.0
      %990 = vmatpush1.msra.mxu0 0.0
      %991 = vmatprep.subr.mxu0 0.0
      %992 = vmatpush1.msra.mxu0 0.0
      %993 = vmatprep.subr.mxu0 0.0
      %994 = vmatpush1.msra.mxu0 0.0
      %995 = vmatprep.subr.mxu0 0.0
      %996 = vmatpush1.msra.mxu0 0.0
      %997 = vmatprep.subr.mxu0 0.0
      %998 = vmatpush1.msra.mxu0 0.0
      %999 = vmatprep.subr.mxu0 0.0
      %1000 = vmatpush1.msra.mxu0 0.0
      %1001 = vmatprep.subr.mxu0 0.0
      %1002 = vmatpush1.msra.mxu0 0.0
      %1003 = vmatprep.subr.mxu0 0.0
      %1004 = vmatpush1.msra.mxu0 0.0
      %1005 = vmatprep.subr.mxu0 0.0
      %1006 = vmatpush1.msra.mxu0 0.0
      %1007 = vmatprep.subr.mxu0 0.0
      %1008 = vmatpush1.msra.mxu0 0.0
      %1009 = vmatprep.subr.mxu0 0.0
      %1010 = vmatpush1.msra.mxu0 0.0
      %1011 = vmatprep.subr.mxu0 0.0
      %1012 = vmatpush1.msra.mxu0 0.0
      %1013 = vmatprep.subr.mxu0 0.0
      %1014 = vmatpush1.msra.mxu0 0.0
      %1015 = vmatprep.subr.mxu0 0.0
      %1016 = vmatpush1.msra.mxu0 0.0
      %1017 = vmatprep.subr.mxu0 0.0
      %1018 = vmatpush1.msra.mxu0 0.0
      %1019 = vmatprep.subr.mxu0 0.0
      %1020 = vmatpush1.msra.mxu0 0.0
      %1021 = vmatprep.subr.mxu0 0.0
      %1022 = vmatpush1.msra.mxu0 0.0
      %1023 = vmatprep.subr.mxu0 0.0
      %1024 = vmatpush1.msra.mxu0 0.0
      %1025 = vmatprep.subr.mxu0 0.0
      %1026 = vmatpush1.msra.mxu0 0.0
      %1027 = vmatprep.subr.mxu0 0.0
      %1028 = vmatpush1.msra.mxu0 0.0
      %1029 = vmatprep.mubr.f32.mxu0 0.0
      %1030 = vmatmul.mubr.f32.gmra.mrb[0].mxu0 %v960
      %v1031 = vpop.f32.mrb[0].mxu0
      %v1032 = vadd.f32 0.0, %v1031
      %v1033 = vpop.f32.mrb[0].mxu0
      %1034 = vmatprep.mubr.f32.mxu0 0.0
      %1035 = vmatmul.mubr.f32.gmra.mrb[0].mxu0 %v963
      %v1036 = vpop.f32.mrb[0].mxu0
      %v1037 = vadd.f32 0.0, %v1036
      %v1038 = vpop.f32.mrb[0].mxu0
      %1039 = vdwg.mxu0
      %v1040 = vadd.f32 %v954, %v1032
      %v1041 = vadd.f32 %v955, %v1037
      %1042 = vst [vmem:[%s288] sm:$0xff] %v1040
      %1043 = vst [vmem:[%s288 + $0x8] sm:$0xff] %v1041
      %s1044 = smul.u32 2, %s23
      %p1045 = scmp.lt.s32.totalorder %s22, 1
      %s1046 = scalar_select %p1045, %s22, 1
      %p1047 = scmp.lt.s32.totalorder %s1044, 1
      %s1048 = scalar_select %p1047, %s1044, 1
      %s1049 = smul.addr %s1046, 2
      %s1050 = sadd.s32 %s1048, %s1049
      %s1051 = smul.addr %s1050, 8
      %s1052 = scalar_lea.vmem %s6, %s1051
      // Predicated region
      $region45: #{disc_classifier_forward.1} parent=43 // pred_check
        %p1053 = pneg %p186
      $region46: #{disc_classifier_forward.1} parent=43 // pred_check_branch
        %1055 = sbr.rel (%p1053) target = $region48
      $region47: #{disc_classifier_forward.1} parent=43 // pred_region
        %s1056 = smul.u32 2, %s23
      $region48: #{disc_classifier_forward.1} parent=43 // pred_fallthru
        _
    $region44: #{disc_classifier_forward.1} parent=5 // pred_fallthru
      _
    %p1057 = scmp.le.s32.totalorder 2, %s13
    // Predicated region
    $region49: #{disc_classifier_forward.1} parent=5 // pred_check
      %p1058 = pneg %p1057
    $region50: #{disc_classifier_forward.1} parent=5 // pred_check_branch
      %1060 = sbr.rel (%p1058) target = $region52
    $region51: #{disc_classifier_forward.1} parent=5 // pred_region
      %s1061 = ssub.s32 %s13, 2
      // Predicated region
      $region53: #{disc_classifier_forward.1} parent=51 // pred_check
        %p1062 = pneg %p192
      $region54: #{disc_classifier_forward.1} parent=51 // pred_check_branch
        %1064 = sbr.rel (%p1062) target = $region56
      $region55: #{disc_classifier_forward.1} parent=51 // pred_region
        %s1065 = smul.u32 2, %s25
        %p1066 = scmp.lt.s32.totalorder %s24, 1
        %s1067 = scalar_select %p1066, %s24, 1
        %p1068 = scmp.lt.s32.totalorder %s1065, 1
        %s1069 = scalar_select %p1068, %s1065, 1
        %s1070 = smul.addr %s1067, 2
        %s1071 = sadd.s32 %s1069, %s1070
        %s1072 = smul.addr %s1071, 8
        %s1073 = scalar_lea.vmem %s6, %s1072
      $region56: #{disc_classifier_forward.1} parent=51 // pred_fallthru
        _
    $region52: #{disc_classifier_forward.1} parent=5 // pred_fallthru
      _
  $region6: #{disc_classifier_forward.1} parent=0 // loop_footer
    %s17 = sadd.s32 1, %s13
  $region7: #{disc_classifier_forward.1} parent=0 // loop_footer_branch
    %12 = sbr.rel target = $region3
  $region8: #{disc_classifier_forward.1} parent=0 // loop_exit
    _

// kernel: disc_classifier_forward.1
$region0: #{disc_classifier_forward.1}
  #allocation0 [shape = 'u32[]', space=smem, size = 0x4, offset = 0x4, fixed_abs, tag = 'smem constant byte address 0x4 - core index']
  #allocation1 [shape = 'u32[144,128]{1,0:T(1,128)}', space=vmem, size = 0x12000, scoped, tag = 'internal scratch']
  #allocation2 [shape = 'f32[1,1]{1,0:T(1,128)S(6)}', space=smem, size = 0x200, scoped, tag = 'scoped memory for disc_classifier_forward.1']
  %s0 = inlined_call_operand.vmem [shape: bf16[2,16,128], index: 0, kind: input, shape index: {}]
  %s1 = inlined_call_operand.vmem [shape: bf16[128,128], index: 1, kind: input, shape index: {}]
  %s2 = inlined_call_operand.vmem [shape: f32[2,1,128], index: 2, kind: input, shape index: {}]
  %s3 = inlined_call_operand.vmem [shape: bf16[128,512], index: 3, kind: input, shape index: {}]
  %s4 = inlined_call_operand.vmem [shape: f32[4,16,16], index: 4, kind: input, shape index: {}]
  %s5 = inlined_call_operand.<no memory space> [shape: f32[1,1], index: 5, kind: input, shape index: {}]
  %s6 = inlined_call_operand.vmem [shape: f32[2,16,128], index: 6, kind: output, shape index: {}]
  %s7 = sld [smem:[#allocation0]]
  $region57: #{disc_classifier_forward.1} parent=0
    _
  %s9 = ssub.s32 1, %s7
  %s10 = scalar_select 0, %s9, %s7
  %11 = sst [smem:[#allocation2]] %s5
  loop: start=0, step=1, limit=4
  $region2: #{disc_classifier_forward.1} parent=0 // loop_pre_header
    _
  $region3: #{disc_classifier_forward.1} parent=0 // loop_header
    %s13 = sphi 0, %s17
    %p14 = scmp.ge.s32.totalorder %s13, 4
    %s20 = sphi 0, %s32
    %s21 = sphi 0, %s28
    %s22 = sphi 0, %s20
    %s23 = sphi 0, %s21
    %s24 = sphi 0, %s22
    %s25 = sphi 0, %s23
    %s35 = sphi 0, %s37
    %s38 = sphi 0, %s35
    %s39 = sphi 0, %s38
    %s55 = sphi 0, %s39
    %s59 = sphi 0, %s59
    %s61 = sphi 0, %s59
    %s62 = sphi 0, %s61
    %s76 = sphi 0, %s62
    %s82 = sphi 0, %s84
    %s85 = sphi 0, %s82
    %s86 = sphi 0, %s85
    %s102 = sphi 0, %s86
    %s106 = sphi 0, %s106
    %s108 = sphi 0, %s106
    %s109 = sphi 0, %s108
    %s123 = sphi 0, %s109
    %s127 = sphi 0, %s127
    %s129 = sphi 0, %s127
    %s130 = sphi 0, %s129
    %s144 = sphi 0, %s130
    %s148 = sphi 0, %s148
    %s150 = sphi 0, %s148
    %s151 = sphi 0, %s150
    %s165 = sphi 0, %s151
    %s173 = sphi 0, %s175
    %s176 = sphi 0, %s173
    %s177 = sphi 0, %s176
    %s193 = sphi 0, %s177
  $region4: #{disc_classifier_forward.1} parent=0 // loop_header_branch
    %16 = sbr.rel (%p14) target = $region8
  $region5: #{disc_classifier_forward.1} parent=0 // loop_body
    %s18 = ssub.s32 %s13, 1
    %s19 = ssub.s32 %s13, 2
    %s26 = sadd.s32 1, %s21
    %p27 = scmp.ge.s32.totalorder %s26, 1
    %s28 = scalar_select %p27, 0, %s26
    %s29 = sadd.s32 1, %s20
    %s30 = scalar_select %p27, %s29, %s20
    %p31 = scmp.ge.s32.totalorder %s30, 2
    %s32 = scalar_select %p31, 0, %s30
    %s33 = ssub.s32 %s20, %s32
    %p34 = scmp.eq.s32.totalorder %s33, 0
    %s36 = sadd.s32 %s35, 1
    %s37 = scalar_select %p34, %s35, %s36
    %p40 = pneg %p34
    %p41 = scmp.eq.s32.totalorder %s13, 1
    %p42 = por %p40, %p41
    %p43 = scmp.ne.s32.totalorder %s35, %s38
    %p44 = scmp.eq.s32.totalorder %s13, 0
    %p45 = por %p43, %p44
    %p46 = scmp.ne.s32.totalorder %s35, %s38
    %p47 = scmp.eq.s32.totalorder %s18, 1
    %p48 = por %p46, %p47
    %p49 = scmp.ne.s32.totalorder %s38, %s39
    %p50 = scmp.eq.s32.totalorder %s18, 0
    %p51 = por %p49, %p50
    %p52 = scmp.ne.s32.totalorder %s38, %s39
    %p53 = scmp.eq.s32.totalorder %s19, 1
    %p54 = por %p52, %p53
    %p56 = scmp.ne.s32.totalorder %s39, %s55
    %p57 = scmp.eq.s32.totalorder %s19, 0
    %p58 = por %p56, %p57
    %s60 = sadd.s32 %s59, 1
    %p63 = scmp.eq.s32.totalorder %s13, 1
    %p64 = scmp.ne.s32.totalorder %s59, %s61
    %p65 = scmp.eq.s32.totalorder %s13, 0
    %p66 = por %p64, %p65
    %p67 = scmp.ne.s32.totalorder %s59, %s61
    %p68 = scmp.eq.s32.totalorder %s18, 1
    %p69 = por %p67, %p68
    %p70 = scmp.ne.s32.totalorder %s61, %s62
    %p71 = scmp.eq.s32.totalorder %s18, 0
    %p72 = por %p70, %p71
    %p73 = scmp.ne.s32.totalorder %s61, %s62
    %p74 = scmp.eq.s32.totalorder %s19, 1
    %p75 = por %p73, %p74
    %p77 = scmp.ne.s32.totalorder %s62, %s76
    %p78 = scmp.eq.s32.totalorder %s19, 0
    %p79 = por %p77, %p78
    %s80 = ssub.s32 %s20, %s32
    %p81 = scmp.eq.s32.totalorder %s80, 0
    %s83 = sadd.s32 %s82, 1
    %s84 = scalar_select %p81, %s82, %s83
    %p87 = pneg %p81
    %p88 = scmp.eq.s32.totalorder %s13, 1
    %p89 = por %p87, %p88
    %p90 = scmp.ne.s32.totalorder %s82, %s85
    %p91 = scmp.eq.s32.totalorder %s13, 0
    %p92 = por %p90, %p91
    %p93 = scmp.ne.s32.totalorder %s82, %s85
    %p94 = scmp.eq.s32.totalorder %s18, 1
    %p95 = por %p93, %p94
    %p96 = scmp.ne.s32.totalorder %s85, %s86
    %p97 = scmp.eq.s32.totalorder %s18, 0
    %p98 = por %p96, %p97
    %p99 = scmp.ne.s32.totalorder %s85, %s86
    %p100 = scmp.eq.s32.totalorder %s19, 1
    %p101 = por %p99, %p100
    %p103 = scmp.ne.s32.totalorder %s86, %s102
    %p104 = scmp.eq.s32.totalorder %s19, 0
    %p105 = por %p103, %p104
    %s107 = sadd.s32 %s106, 1
    %p110 = scmp.eq.s32.totalorder %s13, 1
    %p111 = scmp.ne.s32.totalorder %s106, %s108
    %p112 = scmp.eq.s32.totalorder %s13, 0
    %p113 = por %p111, %p112
    %p114 = scmp.ne.s32.totalorder %s106, %s108
    %p115 = scmp.eq.s32.totalorder %s18, 1
    %p116 = por %p114, %p115
    %p117 = scmp.ne.s32.totalorder %s108, %s109
    %p118 = scmp.eq.s32.totalorder %s18, 0
    %p119 = por %p117, %p118
    %p120 = scmp.ne.s32.totalorder %s108, %s109
    %p121 = scmp.eq.s32.totalorder %s19, 1
    %p122 = por %p120, %p121
    %p124 = scmp.ne.s32.totalorder %s109, %s123
    %p125 = scmp.eq.s32.totalorder %s19, 0
    %p126 = por %p124, %p125
    %s128 = sadd.s32 %s127, 1
    %p131 = scmp.eq.s32.totalorder %s13, 1
    %p132 = scmp.ne.s32.totalorder %s127, %s129
    %p133 = scmp.eq.s32.totalorder %s13, 0
    %p134 = por %p132, %p133
    %p135 = scmp.ne.s32.totalorder %s127, %s129
    %p136 = scmp.eq.s32.totalorder %s18, 1
    %p137 = por %p135, %p136
    %p138 = scmp.ne.s32.totalorder %s129, %s130
    %p139 = scmp.eq.s32.totalorder %s18, 0
    %p140 = por %p138, %p139
    %p141 = scmp.ne.s32.totalorder %s129, %s130
    %p142 = scmp.eq.s32.totalorder %s19, 1
    %p143 = por %p141, %p142
    %p145 = scmp.ne.s32.totalorder %s130, %s144
    %p146 = scmp.eq.s32.totalorder %s19, 0
    %p147 = por %p145, %p146
    %s149 = sadd.s32 %s148, 1
    %p152 = scmp.eq.s32.totalorder %s13, 1
    %p153 = scmp.ne.s32.totalorder %s148, %s150
    %p154 = scmp.eq.s32.totalorder %s13, 0
    %p155 = por %p153, %p154
    %p156 = scmp.ne.s32.totalorder %s148, %s150
    %p157 = scmp.eq.s32.totalorder %s18, 1
    %p158 = por %p156, %p157
    %p159 = scmp.ne.s32.totalorder %s150, %s151
    %p160 = scmp.eq.s32.totalorder %s18, 0
    %p161 = por %p159, %p160
    %p162 = scmp.ne.s32.totalorder %s150, %s151
    %p163 = scmp.eq.s32.totalorder %s19, 1
    %p164 = por %p162, %p163
    %p166 = scmp.ne.s32.totalorder %s151, %s165
    %p167 = scmp.eq.s32.totalorder %s19, 0
    %p168 = por %p166, %p167
    %s169 = ssub.s32 %s20, %s32
    %s170 = ssub.s32 %s21, %s28
    %s171 = sor.u32 %s169, %s170
    %p172 = scmp.eq.s32.totalorder %s171, 0
    %s174 = sadd.s32 %s173, 1
    %s175 = scalar_select %p172, %s173, %s174
    %p178 = pneg %p172
    %p179 = scmp.eq.s32.totalorder %s13, 1
    %p180 = por %p178, %p179
    %p181 = scmp.ne.s32.totalorder %s173, %s176
    %p182 = scmp.eq.s32.totalorder %s13, 0
    %p183 = por %p181, %p182
    %p184 = scmp.ne.s32.totalorder %s173, %s176
    %p185 = scmp.eq.s32.totalorder %s18, 1
    %p186 = por %p184, %p185
    %p187 = scmp.ne.s32.totalorder %s176, %s177
    %p188 = scmp.eq.s32.totalorder %s18, 0
    %p189 = por %p187, %p188
    %p190 = scmp.ne.s32.totalorder %s176, %s177
    %p191 = scmp.eq.s32.totalorder %s19, 1
    %p192 = por %p190, %p191
    %p194 = scmp.ne.s32.totalorder %s177, %s193
    %p195 = scmp.eq.s32.totalorder %s19, 0
    %p196 = por %p194, %p195
    %p197 = scmp.le.s32.totalorder 1, %s13
    %p198 = scmp.lt.s32.totalorder %s13, 3
    %p199 = pnand %p197, %p198
    %p200 = pneg %p199
    // Predicated region
    $region9: #{disc_classifier_forward.1} parent=5 // pred_check
      _
    $region10: #{disc_classifier_forward.1} parent=5 // pred_check_branch
      %202 = sbr.rel (%p199) target = $region12
    $region11: #{disc_classifier_forward.1} parent=5 // pred_region
      %s203 = ssub.s32 %s13, 1
      // Predicated region
      $region13: #{disc_classifier_forward.1} parent=11 // pred_check
        %p204 = pneg %p72
      $region14: #{disc_classifier_forward.1} parent=11 // pred_check_branch
        %206 = sbr.rel (%p204) target = $region16
      $region15: #{disc_classifier_forward.1} parent=11 // pred_region
        _
      $region16: #{disc_classifier_forward.1} parent=11 // pred_fallthru
        _
      // Predicated region
      $region17: #{disc_classifier_forward.1} parent=11 // pred_check
        %p207 = pneg %p119
      $region18: #{disc_classifier_forward.1} parent=11 // pred_check_branch
        %209 = sbr.rel (%p207) target = $region20
      $region19: #{disc_classifier_forward.1} parent=11 // pred_region
        _
      $region20: #{disc_classifier_forward.1} parent=11 // pred_fallthru
        _
      // Predicated region
      $region21: #{disc_classifier_forward.1} parent=11 // pred_check
        %p210 = pneg %p140
      $region22: #{disc_classifier_forward.1} parent=11 // pred_check_branch
        %212 = sbr.rel (%p210) target = $region24
      $region23: #{disc_classifier_forward.1} parent=11 // pred_region
        _
      $region24: #{disc_classifier_forward.1} parent=11 // pred_fallthru
        _
      // Predicated region
      $region25: #{disc_classifier_forward.1} parent=11 // pred_check
        %p213 = pneg %p161
      $region26: #{disc_classifier_forward.1} parent=11 // pred_check_branch
        %215 = sbr.rel (%p213) target = $region28
      $region27: #{disc_classifier_forward.1} parent=11 // pred_region
        _
      $region28: #{disc_classifier_forward.1} parent=11 // pred_fallthru
        _
    $region12: #{disc_classifier_forward.1} parent=5 // pred_fallthru
      _
    %p216 = scmp.lt.s32.totalorder %s13, 2
    // Predicated region
    $region29: #{disc_classifier_forward.1} parent=5 // pred_check
      %p217 = pneg %p216
    $region30: #{disc_classifier_forward.1} parent=5 // pred_check_branch
      %219 = sbr.rel (%p217) target = $region32
    $region31: #{disc_classifier_forward.1} parent=5 // pred_region
      // Predicated region
      $region33: #{disc_classifier_forward.1} parent=31 // pred_check
        %p220 = pneg %p45
      $region34: #{disc_classifier_forward.1} parent=31 // pred_check_branch
        %222 = sbr.rel (%p220) target = $region36
      $region35: #{disc_classifier_forward.1} parent=31 // pred_region
        %p223 = scmp.lt.s32.totalorder %s20, 1
        %s224 = scalar_select %p223, %s20, 1
        %s225 = smul.addr %s224, 2
        %s226 = smul.addr %s225, 4
        %s227 = scalar_lea.vmem %s0, %s226
      $region36: #{disc_classifier_forward.1} parent=31 // pred_fallthru
        _
      // Predicated region
      $region37: #{disc_classifier_forward.1} parent=31 // pred_check
        %p228 = pneg %p92
      $region38: #{disc_classifier_forward.1} parent=31 // pred_check_branch
        %230 = sbr.rel (%p228) target = $region40
      $region39: #{disc_classifier_forward.1} parent=31 // pred_region
        %p231 = scmp.lt.s32.totalorder %s20, 1
        %s232 = scalar_select %p231, %s20, 1
        %s233 = scalar_lea.vmem %s2, %s232
      $region40: #{disc_classifier_forward.1} parent=31 // pred_fallthru
        _
    $region32: #{disc_classifier_forward.1} parent=5 // pred_fallthru
      _
    %p234 = scmp.le.s32.totalorder 1, %s13
    %p235 = scmp.lt.s32.totalorder %s13, 3
    %p236 = pnand %p234, %p235
    %p237 = pneg %p236
    // Predicated region
    $region41: #{disc_classifier_forward.1} parent=5 // pred_check
      _
    $region42: #{disc_classifier_forward.1} parent=5 // pred_check_branch
      %239 = sbr.rel (%p236) target = $region44
    $region43: #{disc_classifier_forward.1} parent=5 // pred_region
      %s240 = ssub.s32 %s13, 1
      %p241 = scmp.lt.s32.totalorder %s22, 1
      %s242 = scalar_select %p241, %s22, 1
      %s243 = smul.addr %s242, 2
      %s244 = smul.addr %s243, 4
      %s245 = scalar_lea.vmem %s0, %s244
      %p246 = pneg %p51
      %p247 = pneg %p48
      %p248 = pneg %p72
      %p249 = pneg %p69
      %p250 = scmp.lt.s32.totalorder %s22, 1
      %s251 = scalar_select %p250, %s22, 1
      %s252 = scalar_lea.vmem %s2, %s251
      %p253 = pneg %p98
      %p254 = pneg %p95
      %p255 = pneg %p119
      %p256 = pneg %p116
      %p257 = pneg %p140
      %p258 = pneg %p137
      %p259 = pneg %p161
      %p260 = pneg %p158
      %p261 = pneg %p189
      %p262 = pneg %p186
      %s263 = smul.u32 2, %s23
      %p264 = scmp.lt.s32.totalorder %s22, 1
      %s265 = scalar_select %p264, %s22, 1
      %p266 = scmp.lt.s32.totalorder %s263, 1
      %s267 = scalar_select %p266, %s263, 1
      %s268 = smul.addr %s265, 2
      %s269 = sadd.s32 %s267, %s268
      %s270 = smul.addr %s269, 8
      %s271 = scalar_lea.vmem %s6, %s270
      %p272 = scmp.lt.s32.totalorder %s22, 1
      %s273 = scalar_select %p272, %s22, 1
      %s274 = smul.addr %s273, 2
      %s275 = smul.addr %s274, 4
      %s276 = scalar_lea.vmem %s0, %s275
      %p277 = scmp.lt.s32.totalorder %s22, 1
      %s278 = scalar_select %p277, %s22, 1
      %s279 = scalar_lea.vmem %s2, %s278
      %s280 = smul.u32 2, %s23
      %p281 = scmp.lt.s32.totalorder %s22, 1
      %s282 = scalar_select %p281, %s22, 1
      %p283 = scmp.lt.s32.totalorder %s280, 1
      %s284 = scalar_select %p283, %s280, 1
      %s285 = smul.addr %s282, 2
      %s286 = sadd.s32 %s284, %s285
      %s287 = smul.addr %s286, 8
      %s288 = scalar_lea.vmem %s6, %s287
      %s289 = smul.u32 2, %s23
      %v291 = vld [vmem:[%s276] sm:$0xf]
      %v292 = vld [vmem:[%s276 + $0x4] sm:$0xf]
      %v293 = vld [vmem:[%s1] sm:$0xf]
      %v294 = vld [vmem:[%s1 + $0x4] sm:$0xf]
      %v295 = vld [vmem:[%s1 + $0x8] sm:$0xf]
      %v296 = vld [vmem:[%s1 + $0xc] sm:$0xf]
      %v297 = vld [vmem:[%s1 + $0x10] sm:$0xf]
      %v298 = vld [vmem:[%s1 + $0x14] sm:$0xf]
      %v299 = vld [vmem:[%s1 + $0x18] sm:$0xf]
      %v300 = vld [vmem:[%s1 + $0x1c] sm:$0xf]
      %v301 = vld [vmem:[%s1 + $0x20] sm:$0xf]
      %v302 = vld [vmem:[%s1 + $0x24] sm:$0xf]
      %v303 = vld [vmem:[%s1 + $0x28] sm:$0xf]
      %v304 = vld [vmem:[%s1 + $0x2c] sm:$0xf]
      %v305 = vld [vmem:[%s1 + $0x30] sm:$0xf]
      %v306 = vld [vmem:[%s1 + $0x34] sm:$0xf]
      %v307 = vld [vmem:[%s1 + $0x38] sm:$0xf]
      %v308 = vld [vmem:[%s1 + $0x3c] sm:$0xf]
      %v309 = vld [vmem:[%s279] sm:$0x1]
      %v311 = vlaneseq
      %v312 = vshrl.u32 %v311, 7
      %v313 = vsub.s32 0, %v312
      %v314 = vrot.slane %v309, %v313
      %v318 = vunpack.c.l.b16 %v291
      %v319 = vunpack.c.l.b16 %v292
      %v320 = vpack.c.b16 %v319, %v318
      %v338 = vunpack.c.l.b16 %v293
      %v339 = vunpack.c.l.b16 %v294
      %v340 = vunpack.c.l.b16 %v295
      %v341 = vunpack.c.l.b16 %v296
      %v342 = vunpack.c.l.b16 %v297
      %v343 = vunpack.c.l.b16 %v298
      %v344 = vunpack.c.l.b16 %v299
      %v345 = vunpack.c.l.b16 %v300
      %v346 = vunpack.c.l.b16 %v301
      %v347 = vunpack.c.l.b16 %v302
      %v348 = vunpack.c.l.b16 %v303
      %v349 = vunpack.c.l.b16 %v304
      %v350 = vunpack.c.l.b16 %v305
      %v351 = vunpack.c.l.b16 %v306
      %v352 = vunpack.c.l.b16 %v307
      %v353 = vunpack.c.l.b16 %v308
      %v354 = vpack.c.b16 %v339, %v338
      %v355 = vpack.c.b16 %v341, %v340
      %v356 = vpack.c.b16 %v343, %v342
      %v357 = vpack.c.b16 %v345, %v344
      %v358 = vpack.c.b16 %v347, %v346
      %v359 = vpack.c.b16 %v349, %v348
      %v360 = vpack.c.b16 %v351, %v350
      %v361 = vpack.c.b16 %v353, %v352
      %370 = vmatprep.subr.bf16.mxu0 0
      %371 = vmatpush1.bf16.msra.mxu0 %v354
      %372 = vmatprep.subr.bf16.mxu0 0
      %373 = vmatpush1.bf16.msra.mxu0 %v355
      %374 = vmatprep.subr.bf16.mxu0 0
      %375 = vmatpush1.bf16.msra.mxu0 %v356
      %376 = vmatprep.subr.bf16.mxu0 0
      %377 = vmatpush1.bf16.msra.mxu0 %v357
      %378 = vmatprep.subr.bf16.mxu0 0
      %379 = vmatpush1.bf16.msra.mxu0 %v358
      %380 = vmatprep.subr.bf16.mxu0 0
      %381 = vmatpush1.bf16.msra.mxu0 %v359
      %382 = vmatprep.subr.bf16.mxu0 0
      %383 = vmatpush1.bf16.msra.mxu0 %v360
      %384 = vmatprep.subr.bf16.mxu0 0
      %385 = vmatpush1.bf16.msra.mxu0 %v361
      %386 = vmatprep.subr.bf16.mxu0 0
      %387 = vmatpush1.bf16.msra.mxu0 0
      %388 = vmatprep.subr.bf16.mxu0 0
      %389 = vmatpush1.bf16.msra.mxu0 0
      %390 = vmatprep.subr.bf16.mxu0 0
      %391 = vmatpush1.bf16.msra.mxu0 0
      %392 = vmatprep.subr.bf16.mxu0 0
      %393 = vmatpush1.bf16.msra.mxu0 0
      %394 = vmatprep.subr.bf16.mxu0 0
      %395 = vmatpush1.bf16.msra.mxu0 0
      %396 = vmatprep.subr.bf16.mxu0 0
      %397 = vmatpush1.bf16.msra.mxu0 0
      %398 = vmatprep.subr.bf16.mxu0 0
      %399 = vmatpush1.bf16.msra.mxu0 0
      %400 = vmatprep.subr.bf16.mxu0 0
      %401 = vmatpush1.bf16.msra.mxu0 0
      %402 = vmatprep.mubr.bf16.mxu0 0
      %403 = vmatmul.mubr.bf16.gmra.mrb[0].mxu0 %v320
      %v404 = vpop.f32.mrb[0].mxu0
      %v405 = vadd.f32 %v314, %v404
      %v406 = vpop.f32.mrb[0].mxu0
      %v407 = vpop.f32.mrb[0].mxu0
      %v408 = vadd.f32 %v314, %v407
      %v409 = vpop.f32.mrb[0].mxu0
      %410 = vdwg.mxu0
      %vm411 = vcmp.gt.f32.partialorder %v405, 0.0
      %vm412 = vcmp.gt.f32.partialorder %v408, 0.0
      %v413 = vmul.f32 %v405, 0.2
      %v414 = vmul.f32 %v408, 0.2
      %v415 = vsel %vm411, %v405, %v413
      %v416 = vsel %vm412, %v408, %v414
      %v417 = vpack.c.bf16 %v416, %v415
      %v418 = vld [vmem:[%s3] sm:$0xff]
      %v419 = vld [vmem:[%s3 + $0x8] sm:$0xff]
      %v420 = vld [vmem:[%s3 + $0x10] sm:$0xff]
      %v421 = vld [vmem:[%s3 + $0x18] sm:$0xff]
      %v422 = vld [vmem:[%s3 + $0x20] sm:$0xff]
      %v423 = vld [vmem:[%s3 + $0x28] sm:$0xff]
      %v424 = vld [vmem:[%s3 + $0x30] sm:$0xff]
      %v425 = vld [vmem:[%s3 + $0x38] sm:$0xff]
      %v426 = vld [vmem:[%s3 + $0x40] sm:$0xff]
      %v427 = vld [vmem:[%s3 + $0x48] sm:$0xff]
      %v428 = vld [vmem:[%s3 + $0x50] sm:$0xff]
      %v429 = vld [vmem:[%s3 + $0x58] sm:$0xff]
      %v430 = vld [vmem:[%s3 + $0x60] sm:$0xff]
      %v431 = vld [vmem:[%s3 + $0x68] sm:$0xff]
      %v432 = vld [vmem:[%s3 + $0x70] sm:$0xff]
      %v433 = vld [vmem:[%s3 + $0x78] sm:$0xff]
      %v434 = vld [vmem:[%s3 + $0x80] sm:$0xff]
      %v435 = vld [vmem:[%s3 + $0x88] sm:$0xff]
      %v436 = vld [vmem:[%s3 + $0x90] sm:$0xff]
      %v437 = vld [vmem:[%s3 + $0x98] sm:$0xff]
      %v438 = vld [vmem:[%s3 + $0xa0] sm:$0xff]
      %v439 = vld [vmem:[%s3 + $0xa8] sm:$0xff]
      %v440 = vld [vmem:[%s3 + $0xb0] sm:$0xff]
      %v441 = vld [vmem:[%s3 + $0xb8] sm:$0xff]
      %v442 = vld [vmem:[%s3 + $0xc0] sm:$0xff]
      %v443 = vld [vmem:[%s3 + $0xc8] sm:$0xff]
      %v444 = vld [vmem:[%s3 + $0xd0] sm:$0xff]
      %v445 = vld [vmem:[%s3 + $0xd8] sm:$0xff]
      %v446 = vld [vmem:[%s3 + $0xe0] sm:$0xff]
      %v447 = vld [vmem:[%s3 + $0xe8] sm:$0xff]
      %v448 = vld [vmem:[%s3 + $0xf0] sm:$0xff]
      %v449 = vld [vmem:[%s3 + $0xf8] sm:$0xff]
      %v482 = vunpack.c.l.b16 %v418
      %v483 = vunpack.c.h.b16 %v418
      %v484 = vunpack.c.l.b16 %v419
      %v485 = vunpack.c.h.b16 %v419
      %v486 = vunpack.c.l.b16 %v420
      %v487 = vunpack.c.h.b16 %v420
      %v488 = vunpack.c.l.b16 %v421
      %v489 = vunpack.c.h.b16 %v421
      %v490 = vunpack.c.l.b16 %v422
      %v491 = vunpack.c.h.b16 %v422
      %v492 = vunpack.c.l.b16 %v423
      %v493 = vunpack.c.h.b16 %v423
      %v494 = vunpack.c.l.b16 %v424
      %v495 = vunpack.c.h.b16 %v424
      %v496 = vunpack.c.l.b16 %v425
      %v497 = vunpack.c.h.b16 %v425
      %v498 = vunpack.c.l.b16 %v426
      %v499 = vunpack.c.h.b16 %v426
      %v500 = vunpack.c.l.b16 %v427
      %v501 = vunpack.c.h.b16 %v427
      %v502 = vunpack.c.l.b16 %v428
      %v503 = vunpack.c.h.b16 %v428
      %v504 = vunpack.c.l.b16 %v429
      %v505 = vunpack.c.h.b16 %v429
      %v506 = vunpack.c.l.b16 %v430
      %v507 = vunpack.c.h.b16 %v430
      %v508 = vunpack.c.l.b16 %v431
      %v509 = vunpack.c.h.b16 %v431
      %v510 = vunpack.c.l.b16 %v432
      %v511 = vunpack.c.h.b16 %v432
      %v512 = vunpack.c.l.b16 %v433
      %v513 = vunpack.c.h.b16 %v433
      %v514 = vunpack.c.l.b16 %v434
      %v515 = vunpack.c.h.b16 %v434
      %v516 = vunpack.c.l.b16 %v435
      %v517 = vunpack.c.h.b16 %v435
      %v518 = vunpack.c.l.b16 %v436
      %v519 = vunpack.c.h.b16 %v436
      %v520 = vunpack.c.l.b16 %v437
      %v521 = vunpack.c.h.b16 %v437
      %v522 = vunpack.c.l.b16 %v438
      %v523 = vunpack.c.h.b16 %v438
      %v524 = vunpack.c.l.b16 %v439
      %v525 = vunpack.c.h.b16 %v439
      %v526 = vunpack.c.l.b16 %v440
      %v527 = vunpack.c.h.b16 %v440
      %v528 = vunpack.c.l.b16 %v441
      %v529 = vunpack.c.h.b16 %v441
      %v530 = vunpack.c.l.b16 %v442
      %v531 = vunpack.c.h.b16 %v442
      %v532 = vunpack.c.l.b16 %v443
      %v533 = vunpack.c.h.b16 %v443
      %v534 = vunpack.c.l.b16 %v444
      %v535 = vunpack.c.h.b16 %v444
      %v536 = vunpack.c.l.b16 %v445
      %v537 = vunpack.c.h.b16 %v445
      %v538 = vunpack.c.l.b16 %v446
      %v539 = vunpack.c.h.b16 %v446
      %v540 = vunpack.c.l.b16 %v447
      %v541 = vunpack.c.h.b16 %v447
      %v542 = vunpack.c.l.b16 %v448
      %v543 = vunpack.c.h.b16 %v448
      %v544 = vunpack.c.l.b16 %v449
      %v545 = vunpack.c.h.b16 %v449
      %v546 = vpack.c.b16 %v486, %v482
      %v547 = vpack.c.b16 %v487, %v483
      %v548 = vpack.c.b16 %v488, %v484
      %v549 = vpack.c.b16 %v489, %v485
      %v550 = vpack.c.b16 %v494, %v490
      %v551 = vpack.c.b16 %v495, %v491
      %v552 = vpack.c.b16 %v496, %v492
      %v553 = vpack.c.b16 %v497, %v493
      %v554 = vpack.c.b16 %v502, %v498
      %v555 = vpack.c.b16 %v503, %v499
      %v556 = vpack.c.b16 %v504, %v500
      %v557 = vpack.c.b16 %v505, %v501
      %v558 = vpack.c.b16 %v510, %v506
      %v559 = vpack.c.b16 %v511, %v507
      %v560 = vpack.c.b16 %v512, %v508
      %v561 = vpack.c.b16 %v513, %v509
      %v562 = vpack.c.b16 %v518, %v514
      %v563 = vpack.c.b16 %v519, %v515
      %v564 = vpack.c.b16 %v520, %v516
      %v565 = vpack.c.b16 %v521, %v517
      %v566 = vpack.c.b16 %v526, %v522
      %v567 = vpack.c.b16 %v527, %v523
      %v568 = vpack.c.b16 %v528, %v524
      %v569 = vpack.c.b16 %v529, %v525
      %v570 = vpack.c.b16 %v534, %v530
      %v571 = vpack.c.b16 %v535, %v531
      %v572 = vpack.c.b16 %v536, %v532
      %v573 = vpack.c.b16 %v537, %v533
      %v574 = vpack.c.b16 %v542, %v538
      %v575 = vpack.c.b16 %v543, %v539
      %v576 = vpack.c.b16 %v544, %v540
      %v577 = vpack.c.b16 %v545, %v541
      %610 = vmatprep.subr.bf16.mxu0 %v547
      %611 = vmatpush1.bf16.msra.mxu0 %v546
      %612 = vmatprep.subr.bf16.mxu0 %v551
      %613 = vmatpush1.bf16.msra.mxu0 %v550
      %614 = vmatprep.subr.bf16.mxu0 %v555
      %615 = vmatpush1.bf16.msra.mxu0 %v554
      %616 = vmatprep.subr.bf16.mxu0 %v559
      %617 = vmatpush1.bf16.msra.mxu0 %v558
      %618 = vmatprep.subr.bf16.mxu0 %v563
      %619 = vmatpush1.bf16.msra.mxu0 %v562
      %620 = vmatprep.subr.bf16.mxu0 %v567
      %621 = vmatpush1.bf16.msra.mxu0 %v566
      %622 = vmatprep.subr.bf16.mxu0 %v571
      %623 = vmatpush1.bf16.msra.mxu0 %v570
      %624 = vmatprep.subr.bf16.mxu0 %v575
      %625 = vmatpush1.bf16.msra.mxu0 %v574
      %626 = vmatprep.subr.bf16.mxu0 0
      %627 = vmatpush1.bf16.msra.mxu0 0
      %628 = vmatprep.subr.bf16.mxu0 0
      %629 = vmatpush1.bf16.msra.mxu0 0
      %630 = vmatprep.subr.bf16.mxu0 0
      %631 = vmatpush1.bf16.msra.mxu0 0
      %632 = vmatprep.subr.bf16.mxu0 0
      %633 = vmatpush1.bf16.msra.mxu0 0
      %634 = vmatprep.subr.bf16.mxu0 0
      %635 = vmatpush1.bf16.msra.mxu0 0
      %636 = vmatprep.subr.bf16.mxu0 0
      %637 = vmatpush1.bf16.msra.mxu0 0
      %638 = vmatprep.subr.bf16.mxu0 0
      %639 = vmatpush1.bf16.msra.mxu0 0
      %640 = vmatprep.subr.bf16.mxu0 0
      %641 = vmatpush1.bf16.msra.mxu0 0
      %642 = vmatprep.mubr.bf16.mxu0 0
      %643 = vmatmul.mubr.bf16.gmra.mrb[0].mxu0 %v417
      %v644 = vpop.f32.mrb[0].mxu0
      %v645 = vadd.f32 0.0, %v644
      %v646 = vpop.f32.mrb[0].mxu0
      %v647 = vadd.f32 0.0, %v646
      %v648 = vpop.f32.mrb[0].mxu0
      %v649 = vadd.f32 0.0, %v648
      %v650 = vpop.f32.mrb[0].mxu0
      %v651 = vadd.f32 0.0, %v650
      %652 = vdwg.mxu0
      %653 = vmatprep.subr.bf16.mxu0 %v549
      %654 = vmatpush1.bf16.msra.mxu0 %v548
      %655 = vmatprep.subr.bf16.mxu0 %v553
      %656 = vmatpush1.bf16.msra.mxu0 %v552
      %657 = vmatprep.subr.bf16.mxu0 %v557
      %658 = vmatpush1.bf16.msra.mxu0 %v556
      %659 = vmatprep.subr.bf16.mxu0 %v561
      %660 = vmatpush1.bf16.msra.mxu0 %v560
      %661 = vmatprep.subr.bf16.mxu0 %v565
      %662 = vmatpush1.bf16.msra.mxu0 %v564
      %663 = vmatprep.subr.bf16.mxu0 %v569
      %664 = vmatpush1.bf16.msra.mxu0 %v568
      %665 = vmatprep.subr.bf16.mxu0 %v573
      %666 = vmatpush1.bf16.msra.mxu0 %v572
      %667 = vmatprep.subr.bf16.mxu0 %v577
      %668 = vmatpush1.bf16.msra.mxu0 %v576
      %669 = vmatprep.subr.bf16.mxu0 0
      %670 = vmatpush1.bf16.msra.mxu0 0
      %671 = vmatprep.subr.bf16.mxu0 0
      %672 = vmatpush1.bf16.msra.mxu0 0
      %673 = vmatprep.subr.bf16.mxu0 0
      %674 = vmatpush1.bf16.msra.mxu0 0
      %675 = vmatprep.subr.bf16.mxu0 0
      %676 = vmatpush1.bf16.msra.mxu0 0
      %677 = vmatprep.subr.bf16.mxu0 0
      %678 = vmatpush1.bf16.msra.mxu0 0
      %679 = vmatprep.subr.bf16.mxu0 0
      %680 = vmatpush1.bf16.msra.mxu0 0
      %681 = vmatprep.subr.bf16.mxu0 0
      %682 = vmatpush1.bf16.msra.mxu0 0
      %683 = vmatprep.subr.bf16.mxu0 0
      %684 = vmatpush1.bf16.msra.mxu0 0
      %685 = vmatprep.mubr.bf16.mxu0 0
      %686 = vmatmul.mubr.bf16.gmra.mrb[0].mxu0 %v417
      %v687 = vpop.f32.mrb[0].mxu0
      %v688 = vadd.f32 0.0, %v687
      %v689 = vpop.f32.mrb[0].mxu0
      %v690 = vadd.f32 0.0, %v689
      %v691 = vpop.f32.mrb[0].mxu0
      %v692 = vadd.f32 0.0, %v691
      %v693 = vpop.f32.mrb[0].mxu0
      %v694 = vadd.f32 0.0, %v693
      %695 = vdwg.mxu0
      %s696 = sld [smem:[#allocation2]]
      %v697 = vstv %s696
      %v698 = vld [vmem:[%s4] sm:$0xff]
      %v699 = vld [vmem:[%s4 + $0x8] sm:$0xff]
      %vm700 = vcmask 130048
      %v702 = vsel %vm700, %v698, 0
      %v705 = vsel %vm700, %v699, 0
      %707 = vmatprep.subr.mxu0 0.0
      %708 = vmatpush1.msra.mxu0 %v645
      %709 = vmatprep.subr.mxu0 0.0
      %710 = vmatpush1.msra.mxu0 %v649
      %711 = vmatprep.subr.mxu0 0.0
      %712 = vmatpush1.msra.mxu0 0.0
      %713 = vmatprep.subr.mxu0 0.0
      %714 = vmatpush1.msra.mxu0 0.0
      %715 = vmatprep.subr.mxu0 0.0
      %716 = vmatpush1.msra.mxu0 0.0
      %717 = vmatprep.subr.mxu0 0.0
      %718 = vmatpush1.msra.mxu0 0.0
      %719 = vmatprep.subr.mxu0 0.0
      %720 = vmatpush1.msra.mxu0 0.0
      %721 = vmatprep.subr.mxu0 0.0
      %722 = vmatpush1.msra.mxu0 0.0
      %723 = vmatprep.subr.mxu0 0.0
      %724 = vmatpush1.msra.mxu0 0.0
      %725 = vmatprep.subr.mxu0 0.0
      %726 = vmatpush1.msra.mxu0 0.0
      %727 = vmatprep.subr.mxu0 0.0
      %728 = vmatpush1.msra.mxu0 0.0
      %729 = vmatprep.subr.mxu0 0.0
      %730 = vmatpush1.msra.mxu0 0.0
      %731 = vmatprep.subr.mxu0 0.0
      %732 = vmatpush1.msra.mxu0 0.0
      %733 = vmatprep.subr.mxu0 0.0
      %734 = vmatpush1.msra.mxu0 0.0
      %735 = vmatprep.subr.mxu0 0.0
      %736 = vmatpush1.msra.mxu0 0.0
      %737 = vmatprep.subr.mxu0 0.0
      %738 = vmatpush1.msra.mxu0 0.0
      %739 = vmatprep.subr.mxu0 0.0
      %740 = vmatpush1.msra.mxu0 0.0
      %741 = vmatprep.subr.mxu0 0.0
      %742 = vmatpush1.msra.mxu0 0.0
      %743 = vmatprep.subr.mxu0 0.0
      %744 = vmatpush1.msra.mxu0 0.0
      %745 = vmatprep.subr.mxu0 0.0
      %746 = vmatpush1.msra.mxu0 0.0
      %747 = vmatprep.subr.mxu0 0.0
      %748 = vmatpush1.msra.mxu0 0.0
      %749 = vmatprep.subr.mxu0 0.0
      %750 = vmatpush1.msra.mxu0 0.0
      %751 = vmatprep.subr.mxu0 0.0
      %752 = vmatpush1.msra.mxu0 0.0
      %753 = vmatprep.subr.mxu0 0.0
      %754 = vmatpush1.msra.mxu0 0.0
      %755 = vmatprep.subr.mxu0 0.0
      %756 = vmatpush1.msra.mxu0 0.0
      %757 = vmatprep.subr.mxu0 0.0
      %758 = vmatpush1.msra.mxu0 0.0
      %759 = vmatprep.subr.mxu0 0.0
      %760 = vmatpush1.msra.mxu0 0.0
      %761 = vmatprep.subr.mxu0 0.0
      %762 = vmatpush1.msra.mxu0 0.0
      %763 = vmatprep.subr.mxu0 0.0
      %764 = vmatpush1.msra.mxu0 0.0
      %765 = vmatprep.subr.mxu0 0.0
      %766 = vmatpush1.msra.mxu0 0.0
      %767 = vmatprep.subr.mxu0 0.0
      %768 = vmatpush1.msra.mxu0 0.0
      %769 = vmatprep.subr.mxu0 0.0
      %770 = vmatpush1.msra.mxu0 0.0
      %771 = vmatprep.mubr.f32.mxu0 0.0
      %772 = vmatmul.mubr.f32.gmra.mrb[0].mxu0 %v702
      %v773 = vpop.f32.mrb[0].mxu0
      %v774 = vadd.f32 0.0, %v773
      %v775 = vpop.f32.mrb[0].mxu0
      %776 = vmatprep.mubr.f32.mxu0 0.0
      %777 = vmatmul.mubr.f32.gmra.mrb[0].mxu0 %v705
      %v778 = vpop.f32.mrb[0].mxu0
      %v779 = vadd.f32 0.0, %v778
      %v780 = vpop.f32.mrb[0].mxu0
      %781 = vdwg.mxu0
      %v782 = vadd.f32 %v697, %v774
      %v783 = vadd.f32 %v697, %v779
      %s784 = scalar_lea.vmem %s4, 16
      %v785 = vld [vmem:[%s784] sm:$0xff]
      %v786 = vld [vmem:[%s784 + $0x8] sm:$0xff]
      %v788 = vsel %vm700, %v785, 0
      %v791 = vsel %vm700, %v786, 0
      %793 = vmatprep.subr.mxu0 0.0
      %794 = vmatpush1.msra.mxu0 %v647
      %795 = vmatprep.subr.mxu0 0.0
      %796 = vmatpush1.msra.mxu0 %v651
      %797 = vmatprep.subr.mxu0 0.0
      %798 = vmatpush1.msra.mxu0 0.0
      %799 = vmatprep.subr.mxu0 0.0
      %800 = vmatpush1.msra.mxu0 0.0
      %801 = vmatprep.subr.mxu0 0.0
      %802 = vmatpush1.msra.mxu0 0.0
      %803 = vmatprep.subr.mxu0 0.0
      %804 = vmatpush1.msra.mxu0 0.0
      %805 = vmatprep.subr.mxu0 0.0
      %806 = vmatpush1.msra.mxu0 0.0
      %807 = vmatprep.subr.mxu0 0.0
      %808 = vmatpush1.msra.mxu0 0.0
      %809 = vmatprep.subr.mxu0 0.0
      %810 = vmatpush1.msra.mxu0 0.0
      %811 = vmatprep.subr.mxu0 0.0
      %812 = vmatpush1.msra.mxu0 0.0
      %813 = vmatprep.subr.mxu0 0.0
      %814 = vmatpush1.msra.mxu0 0.0
      %815 = vmatprep.subr.mxu0 0.0
      %816 = vmatpush1.msra.mxu0 0.0
      %817 = vmatprep.subr.mxu0 0.0
      %818 = vmatpush1.msra.mxu0 0.0
      %819 = vmatprep.subr.mxu0 0.0
      %820 = vmatpush1.msra.mxu0 0.0
      %821 = vmatprep.subr.mxu0 0.0
      %822 = vmatpush1.msra.mxu0 0.0
      %823 = vmatprep.subr.mxu0 0.0
      %824 = vmatpush1.msra.mxu0 0.0
      %825 = vmatprep.subr.mxu0 0.0
      %826 = vmatpush1.msra.mxu0 0.0
      %827 = vmatprep.subr.mxu0 0.0
      %828 = vmatpush1.msra.mxu0 0.0
      %829 = vmatprep.subr.mxu0 0.0
      %830 = vmatpush1.msra.mxu0 0.0
      %831 = vmatprep.subr.mxu0 0.0
      %832 = vmatpush1.msra.mxu0 0.0
      %833 = vmatprep.subr.mxu0 0.0
      %834 = vmatpush1.msra.mxu0 0.0
      %835 = vmatprep.subr.mxu0 0.0
      %836 = vmatpush1.msra.mxu0 0.0
      %837 = vmatprep.subr.mxu0 0.0
      %838 = vmatpush1.msra.mxu0 0.0
      %839 = vmatprep.subr.mxu0 0.0
      %840 = vmatpush1.msra.mxu0 0.0
      %841 = vmatprep.subr.mxu0 0.0
      %842 = vmatpush1.msra.mxu0 0.0
      %843 = vmatprep.subr.mxu0 0.0
      %844 = vmatpush1.msra.mxu0 0.0
      %845 = vmatprep.subr.mxu0 0.0
      %846 = vmatpush1.msra.mxu0 0.0
      %847 = vmatprep.subr.mxu0 0.0
      %848 = vmatpush1.msra.mxu0 0.0
      %849 = vmatprep.subr.mxu0 0.0
      %850 = vmatpush1.msra.mxu0 0.0
      %851 = vmatprep.subr.mxu0 0.0
      %852 = vmatpush1.msra.mxu0 0.0
      %853 = vmatprep.subr.mxu0 0.0
      %854 = vmatpush1.msra.mxu0 0.0
      %855 = vmatprep.subr.mxu0 0.0
      %856 = vmatpush1.msra.mxu0 0.0
      %857 = vmatprep.mubr.f32.mxu0 0.0
      %858 = vmatmul.mubr.f32.gmra.mrb[0].mxu0 %v788
      %v859 = vpop.f32.mrb[0].mxu0
      %v860 = vadd.f32 0.0, %v859
      %v861 = vpop.f32.mrb[0].mxu0
      %862 = vmatprep.mubr.f32.mxu0 0.0
      %863 = vmatmul.mubr.f32.gmra.mrb[0].mxu0 %v791
      %v864 = vpop.f32.mrb[0].mxu0
      %v865 = vadd.f32 0.0, %v864
      %v866 = vpop.f32.mrb[0].mxu0
      %867 = vdwg.mxu0
      %v868 = vadd.f32 %v782, %v860
      %v869 = vadd.f32 %v783, %v865
      %s870 = scalar_lea.vmem %s4, 32
      %v871 = vld [vmem:[%s870] sm:$0xff]
      %v872 = vld [vmem:[%s870 + $0x8] sm:$0xff]
      %v874 = vsel %vm700, %v871, 0
      %v877 = vsel %vm700, %v872, 0
      %879 = vmatprep.subr.mxu0 0.0
      %880 = vmatpush1.msra.mxu0 %v688
      %881 = vmatprep.subr.mxu0 0.0
      %882 = vmatpush1.msra.mxu0 %v692
      %883 = vmatprep.subr.mxu0 0.0
      %884 = vmatpush1.msra.mxu0 0.0
      %885 = vmatprep.subr.mxu0 0.0
      %886 = vmatpush1.msra.mxu0 0.0
      %887 = vmatprep.subr.mxu0 0.0
      %888 = vmatpush1.msra.mxu0 0.0
      %889 = vmatprep.subr.mxu0 0.0
      %890 = vmatpush1.msra.mxu0 0.0
      %891 = vmatprep.subr.mxu0 0.0
      %892 = vmatpush1.msra.mxu0 0.0
      %893 = vmatprep.subr.mxu0 0.0
      %894 = vmatpush1.msra.mxu0 0.0
      %895 = vmatprep.subr.mxu0 0.0
      %896 = vmatpush1.msra.mxu0 0.0
      %897 = vmatprep.subr.mxu0 0.0
      %898 = vmatpush1.msra.mxu0 0.0
      %899 = vmatprep.subr.mxu0 0.0
      %900 = vmatpush1.msra.mxu0 0.0
      %901 = vmatprep.subr.mxu0 0.0
      %902 = vmatpush1.msra.mxu0 0.0
      %903 = vmatprep.subr.mxu0 0.0
      %904 = vmatpush1.msra.mxu0 0.0
      %905 = vmatprep.subr.mxu0 0.0
      %906 = vmatpush1.msra.mxu0 0.0
      %907 = vmatprep.subr.mxu0 0.0
      %908 = vmatpush1.msra.mxu0 0.0
      %909 = vmatprep.subr.mxu0 0.0
      %910 = vmatpush1.msra.mxu0 0.0
      %911 = vmatprep.subr.mxu0 0.0
      %912 = vmatpush1.msra.mxu0 0.0
      %913 = vmatprep.subr.mxu0 0.0
      %914 = vmatpush1.msra.mxu0 0.0
      %915 = vmatprep.subr.mxu0 0.0
      %916 = vmatpush1.msra.mxu0 0.0
      %917 = vmatprep.subr.mxu0 0.0
      %918 = vmatpush1.msra.mxu0 0.0
      %919 = vmatprep.subr.mxu0 0.0
      %920 = vmatpush1.msra.mxu0 0.0
      %921 = vmatprep.subr.mxu0 0.0
      %922 = vmatpush1.msra.mxu0 0.0
      %923 = vmatprep.subr.mxu0 0.0
      %924 = vmatpush1.msra.mxu0 0.0
      %925 = vmatprep.subr.mxu0 0.0
      %926 = vmatpush1.msra.mxu0 0.0
      %927 = vmatprep.subr.mxu0 0.0
      %928 = vmatpush1.msra.mxu0 0.0
      %929 = vmatprep.subr.mxu0 0.0
      %930 = vmatpush1.msra.mxu0 0.0
      %931 = vmatprep.subr.mxu0 0.0
      %932 = vmatpush1.msra.mxu0 0.0
      %933 = vmatprep.subr.mxu0 0.0
      %934 = vmatpush1.msra.mxu0 0.0
      %935 = vmatprep.subr.mxu0 0.0
      %936 = vmatpush1.msra.mxu0 0.0
      %937 = vmatprep.subr.mxu0 0.0
      %938 = vmatpush1.msra.mxu0 0.0
      %939 = vmatprep.subr.mxu0 0.0
      %940 = vmatpush1.msra.mxu0 0.0
      %941 = vmatprep.subr.mxu0 0.0
      %942 = vmatpush1.msra.mxu0 0.0
      %943 = vmatprep.mubr.f32.mxu0 0.0
      %944 = vmatmul.mubr.f32.gmra.mrb[0].mxu0 %v874
      %v945 = vpop.f32.mrb[0].mxu0
      %v946 = vadd.f32 0.0, %v945
      %v947 = vpop.f32.mrb[0].mxu0
      %948 = vmatprep.mubr.f32.mxu0 0.0
      %949 = vmatmul.mubr.f32.gmra.mrb[0].mxu0 %v877
      %v950 = vpop.f32.mrb[0].mxu0
      %v951 = vadd.f32 0.0, %v950
      %v952 = vpop.f32.mrb[0].mxu0
      %953 = vdwg.mxu0
      %v954 = vadd.f32 %v868, %v946
      %v955 = vadd.f32 %v869, %v951
      %s956 = scalar_lea.vmem %s4, 48
      %v957 = vld [vmem:[%s956] sm:$0xff]
      %v958 = vld [vmem:[%s956 + $0x8] sm:$0xff]
      %v960 = vsel %vm700, %v957, 0
      %v963 = vsel %vm700, %v958, 0
      %965 = vmatprep.subr.mxu0 0.0
      %966 = vmatpush1.msra.mxu0 %v690
      %967 = vmatprep.subr.mxu0 0.0
      %968 = vmatpush1.msra.mxu0 %v694
      %969 = vmatprep.subr.mxu0 0.0
      %970 = vmatpush1.msra.mxu0 0.0
      %971 = vmatprep.subr.mxu0 0.0
      %972 = vmatpush1.msra.mxu0 0.0
      %973 = vmatprep.subr.mxu0 0.0
      %974 = vmatpush1.msra.mxu0 0.0
      %975 = vmatprep.subr.mxu0 0.0
      %976 = vmatpush1.msra.mxu0 0.0
      %977 = vmatprep.subr.mxu0 0.0
      %978 = vmatpush1.msra.mxu0 0.0
      %979 = vmatprep.subr.mxu0 0.0
      %980 = vmatpush1.msra.mxu0 0.0
      %981 = vmatprep.subr.mxu0 0.0
      %982 = vmatpush1.msra.mxu0 0.0
      %983 = vmatprep.subr.mxu0 0.0
      %984 = vmatpush1.msra.mxu0 0.0
      %985 = vmatprep.subr.mxu0 0.0
      %986 = vmatpush1.msra.mxu0 0.0
      %987 = vmatprep.subr.mxu0 0.0
      %988 = vmatpush1.msra.mxu0 0.0
      %989 = vmatprep.subr.mxu0 0.0
      %990 = vmatpush1.msra.mxu0 0.0
      %991 = vmatprep.subr.mxu0 0.0
      %992 = vmatpush1.msra.mxu0 0.0
      %993 = vmatprep.subr.mxu0 0.0
      %994 = vmatpush1.msra.mxu0 0.0
      %995 = vmatprep.subr.mxu0 0.0
      %996 = vmatpush1.msra.mxu0 0.0
      %997 = vmatprep.subr.mxu0 0.0
      %998 = vmatpush1.msra.mxu0 0.0
      %999 = vmatprep.subr.mxu0 0.0
      %1000 = vmatpush1.msra.mxu0 0.0
      %1001 = vmatprep.subr.mxu0 0.0
      %1002 = vmatpush1.msra.mxu0 0.0
      %1003 = vmatprep.subr.mxu0 0.0
      %1004 = vmatpush1.msra.mxu0 0.0
      %1005 = vmatprep.subr.mxu0 0.0
      %1006 = vmatpush1.msra.mxu0 0.0
      %1007 = vmatprep.subr.mxu0 0.0
      %1008 = vmatpush1.msra.mxu0 0.0
      %1009 = vmatprep.subr.mxu0 0.0
      %1010 = vmatpush1.msra.mxu0 0.0
      %1011 = vmatprep.subr.mxu0 0.0
      %1012 = vmatpush1.msra.mxu0 0.0
      %1013 = vmatprep.subr.mxu0 0.0
      %1014 = vmatpush1.msra.mxu0 0.0
      %1015 = vmatprep.subr.mxu0 0.0
      %1016 = vmatpush1.msra.mxu0 0.0
      %1017 = vmatprep.subr.mxu0 0.0
      %1018 = vmatpush1.msra.mxu0 0.0
      %1019 = vmatprep.subr.mxu0 0.0
      %1020 = vmatpush1.msra.mxu0 0.0
      %1021 = vmatprep.subr.mxu0 0.0
      %1022 = vmatpush1.msra.mxu0 0.0
      %1023 = vmatprep.subr.mxu0 0.0
      %1024 = vmatpush1.msra.mxu0 0.0
      %1025 = vmatprep.subr.mxu0 0.0
      %1026 = vmatpush1.msra.mxu0 0.0
      %1027 = vmatprep.subr.mxu0 0.0
      %1028 = vmatpush1.msra.mxu0 0.0
      %1029 = vmatprep.mubr.f32.mxu0 0.0
      %1030 = vmatmul.mubr.f32.gmra.mrb[0].mxu0 %v960
      %v1031 = vpop.f32.mrb[0].mxu0
      %v1032 = vadd.f32 0.0, %v1031
      %v1033 = vpop.f32.mrb[0].mxu0
      %1034 = vmatprep.mubr.f32.mxu0 0.0
      %1035 = vmatmul.mubr.f32.gmra.mrb[0].mxu0 %v963
      %v1036 = vpop.f32.mrb[0].mxu0
      %v1037 = vadd.f32 0.0, %v1036
      %v1038 = vpop.f32.mrb[0].mxu0
      %1039 = vdwg.mxu0
      %v1040 = vadd.f32 %v954, %v1032
      %v1041 = vadd.f32 %v955, %v1037
      %1042 = vst [vmem:[%s288] sm:$0xff] %v1040
      %1043 = vst [vmem:[%s288 + $0x8] sm:$0xff] %v1041
      %s1044 = smul.u32 2, %s23
      %p1045 = scmp.lt.s32.totalorder %s22, 1
      %s1046 = scalar_select %p1045, %s22, 1
      %p1047 = scmp.lt.s32.totalorder %s1044, 1
      %s1048 = scalar_select %p1047, %s1044, 1
      %s1049 = smul.addr %s1046, 2
      %s1050 = sadd.s32 %s1048, %s1049
      %s1051 = smul.addr %s1050, 8
      %s1052 = scalar_lea.vmem %s6, %s1051
      // Predicated region
      $region45: #{disc_classifier_forward.1} parent=43 // pred_check
        %p1053 = pneg %p186
      $region46: #{disc_classifier_forward.1} parent=43 // pred_check_branch
        %1055 = sbr.rel (%p1053) target = $region48
      $region47: #{disc_classifier_forward.1} parent=43 // pred_region
        %s1056 = smul.u32 2, %s23
      $region48: #{disc_classifier_forward.1} parent=43 // pred_fallthru
        _
    $region44: #{disc_classifier_forward.1} parent=5 // pred_fallthru
      _
    %p1057 = scmp.le.s32.totalorder 2, %s13
    // Predicated region
    $region49: #{disc_classifier_forward.1} parent=5 // pred_check
      %p1058 = pneg %p1057
    $region50: #{disc_classifier_forward.1} parent=5 // pred_check_branch
      %1060 = sbr.rel (%p1058) target = $region52
    $region51: #{disc_classifier_forward.1} parent=5 // pred_region
      %s1061 = ssub.s32 %s13, 2
      // Predicated region
      $region53: #{disc_classifier_forward.1} parent=51 // pred_check
        %p1062 = pneg %p192
      $region54: #{disc_classifier_forward.1} parent=51 // pred_check_branch
        %1064 = sbr.rel (%p1062) target = $region56
      $region55: #{disc_classifier_forward.1} parent=51 // pred_region
        %s1065 = smul.u32 2, %s25
        %p1066 = scmp.lt.s32.totalorder %s24, 1
        %s1067 = scalar_select %p1066, %s24, 1
        %p1068 = scmp.lt.s32.totalorder %s1065, 1
        %s1069 = scalar_select %p1068, %s1065, 1
        %s1070 = smul.addr %s1067, 2
        %s1071 = sadd.s32 %s1069, %s1070
        %s1072 = smul.addr %s1071, 8
        %s1073 = scalar_lea.vmem %s6, %s1072
      $region56: #{disc_classifier_forward.1} parent=51 // pred_fallthru
        _
    $region52: #{disc_classifier_forward.1} parent=5 // pred_fallthru
      _
  $region6: #{disc_classifier_forward.1} parent=0 // loop_footer
    %s17 = sadd.s32 1, %s13
  $region7: #{disc_classifier_forward.1} parent=0 // loop_footer_branch
    %12 = sbr.rel target = $region3
  $region8: #{disc_classifier_forward.1} parent=0 // loop_exit
    _

</llo_original>
